<compile_context>
chip_gen: v5e
topology: v5e:2x2
jax: 0.10.0
libtpu: 0.0.40
codegen_flags: <defaults>
</compile_context>

<pallas_src>
import functools

import jax
import jax.numpy as jnp
from jax import lax
from jax.experimental import pallas as pl
from jax.experimental.pallas import tpu as pltpu


# ----------------------------------------------------------------------------
# Pallas kernel: fused window attention for a block of `windows_per_block`
# windows (one grid step).
# ----------------------------------------------------------------------------
def _attention_kernel(x_ref, wqkv_ref, bqkv_ref, wproj_ref, bproj_ref,
                      bias_ref, o_ref, *, num_heads, head_dim,
                      tokens_per_window, windows_per_block):
    H, hd, N, Bt = num_heads, head_dim, tokens_per_window, windows_per_block
    T = Bt * N
    C = H * hd
    HB = H * Bt

    x = x_ref[...]                                        # (T, C) bf16

    # ---- Fused QKV projection: single MXU call, f32 accumulate + bias.
    # (attention scale is pre-folded into the q columns of wqkv/bqkv).
    qkv = jnp.dot(x, wqkv_ref[...], preferred_element_type=jnp.float32)
    qkv = (qkv + bqkv_ref[...]).astype(jnp.bfloat16)      # (T, 3C) bf16

    # ---- Relayout heads from the lane axis into a (head, window) batch axis
    # for the attention core.  Only static lane slices + major-axis concats;
    # the (T, hd) -> (Bt, N, hd) split is at sublane-tile boundaries
    # (N % 8 == 0 for this config) so it is layout preserving.
    def split_heads(col0):
        parts = [qkv[:, col0 + h * hd: col0 + (h + 1) * hd]
                 .reshape(1, Bt, N, hd) for h in range(H)]
        return jnp.concatenate(parts, axis=0).reshape(HB, N, hd)

    q3 = split_heads(0)                                   # (HB, N, hd) bf16
    k3 = split_heads(C)
    v3 = split_heads(2 * C)

    # ---- scores = q @ k^T : (HB, N, N) f32 (batched over head*window)
    scores = lax.dot_general(q3, k3, (((2,), (2,)), ((0,), (0,))),
                             preferred_element_type=jnp.float32)

    # + relative position bias (per head, broadcast over windows); f32 softmax.
    scores = scores.reshape(H, Bt, N, N) + bias_ref[...][:, None, :, :]
    scores = scores - jnp.max(scores, axis=-1, keepdims=True)
    p = jnp.exp(scores)
    p = p * pl.reciprocal(jnp.sum(p, axis=-1, keepdims=True), approx=True)
    p = p.reshape(HB, N, N).astype(jnp.bfloat16)

    # ---- attn @ v : (HB, N, hd) f32
    ctx = lax.dot_general(p, v3, (((2,), (1,)), ((0,), (0,))),
                          preferred_element_type=jnp.float32)

    # ---- Repack heads back into the lane axis: (HB, N, hd) -> (T, C) bf16,
    # then one fused output projection with a full K = C contraction.
    ctx = ctx.astype(jnp.bfloat16).reshape(H, T, hd)
    ctx_t = jnp.concatenate([ctx[h] for h in range(H)], axis=-1)   # (T, C)

    y = jnp.dot(ctx_t, wproj_ref[...], preferred_element_type=jnp.float32)
    y = y + bproj_ref[...]                                         # (T, C) f32

    o_ref[...] = y.astype(o_ref.dtype)                    # one whole-block store


# ----------------------------------------------------------------------------
# Wrapper
# ----------------------------------------------------------------------------
def _pick_windows_per_block(B_, N, *, max_rows=256, min_grid=4):
    """Largest windows/block with sublane-aligned row count, preferring >= 4
    grid steps (>= 2 per TensorCore on v7x), capped by vreg-pressure rows."""
    cands = [d for d in range(1, B_ + 1)
             if B_ % d == 0 and (d * N) % 8 == 0 and d * N <= max_rows]
    if not cands:
        return B_                      # full-extent block fallback (always legal)
    for g in (min_grid, 2, 1):
        ok = [d for d in cands if B_ // d >= g]
        if ok:
            return max(ok)
    return max(cands)


def attention_pallas(x, wqkv, bqkv, wproj, bproj, rel_pos_bias, num_heads,
                     scale, *, windows_per_block=None):
    """x: (B_, N, C); wqkv: (C, 3C); bqkv: (3C,); wproj: (C, C); bproj: (C,);
    rel_pos_bias: (num_heads, N, N).  Weights stored (in, out): y = x @ W + b."""
    B_, N, C = x.shape
    H = num_heads
    hd = C // H
    # TODO(synk): N not a multiple of 8 (e.g. 7x7 = 49 groups) needs padded
    # tokens + masked softmax; this kernel assumes sublane-aligned N.

    if windows_per_block is None:
        windows_per_block = _pick_windows_per_block(B_, N)
    Bt = windows_per_block
    assert B_ % Bt == 0
    T = Bt * N

    # Static wrapper-side weight prep (free): fold attention scale into the q
    # columns, keep weights as plain 2-D bf16 MXU operands, biases f32.
    wqkv_f = jnp.concatenate([wqkv[:, :C] * scale, wqkv[:, C:]],
                             axis=1).astype(jnp.bfloat16)            # (C, 3C)
    bqkv_f = jnp.concatenate([bqkv[:C] * scale, bqkv[C:]]
                             ).reshape(1, 3 * C).astype(jnp.float32)  # (1, 3C)
    wproj_f = wproj.astype(jnp.bfloat16)                              # (C, C)
    bproj_f = bproj.reshape(1, C).astype(jnp.float32)                 # (1, C)
    rpb = rel_pos_bias.astype(jnp.float32)                            # (H, N, N)

    # bf16 activations into the kernel (halves input HBM traffic; MXU operands
    # are bf16 anyway).  Output keeps the module dtype.
    x_flat = x.reshape(B_ * N, C).astype(jnp.bfloat16)

    kernel = functools.partial(_attention_kernel, num_heads=H, head_dim=hd,
                               tokens_per_window=N, windows_per_block=Bt)

    out = pl.pallas_call(
        kernel,
        out_shape=jax.ShapeDtypeStruct((B_ * N, C), x.dtype),
        grid_spec=pltpu.PrefetchScalarGridSpec(
            num_scalar_prefetch=0,
            grid=(B_ // Bt,),
            in_specs=[
                pl.BlockSpec((T, C), lambda i: (i, 0)),        # x (bf16)
                pl.BlockSpec((C, 3 * C), lambda i: (0, 0)),    # fused qkv W
                pl.BlockSpec((1, 3 * C), lambda i: (0, 0)),    # fused qkv b
                pl.BlockSpec((C, C), lambda i: (0, 0)),        # proj W
                pl.BlockSpec((1, C), lambda i: (0, 0)),        # proj b
                pl.BlockSpec((H, N, N), lambda i: (0, 0, 0)),  # rel pos bias
            ],
            out_specs=pl.BlockSpec((T, C), lambda i: (i, 0)),
        ),
        compiler_params=pltpu.CompilerParams(
            dimension_semantics=("parallel",)),
    )(x_flat, wqkv_f, bqkv_f, wproj_f, bproj_f, rpb)
    return out.reshape(B_, N, C)


# ----------------------------------------------------------------------------
# Glue: DynamicPosBias MLP + relative position index (tiny, plain JAX)
# ----------------------------------------------------------------------------
def _layer_norm(x, gamma, beta, eps=1e-5):
    mu = jnp.mean(x, axis=-1, keepdims=True)
    var = jnp.mean((x - mu) ** 2, axis=-1, keepdims=True)
    return (x - mu) / jnp.sqrt(var + eps) * gamma + beta


def dynamic_pos_bias(biases, p):
    # residual=False path: pos3(pos2(pos1(pos_proj(biases))))
    pos = biases @ p["w_proj"] + p["b_proj"]
    pos = jnp.maximum(_layer_norm(pos, p["g1"], p["be1"]), 0.0) @ p["w1"] + p["b1"]
    pos = jnp.maximum(_layer_norm(pos, p["g2"], p["be2"]), 0.0) @ p["w2"] + p["b2"]
    pos = jnp.maximum(_layer_norm(pos, p["g3"], p["be3"]), 0.0) @ p["w3"] + p["b3"]
    return pos                                                # (M, num_heads)


def build_relative_position_bias(group_size, num_heads, pos_params):
    Gh, Gw = group_size
    pbh = jnp.arange(1 - Gh, Gh)
    pbw = jnp.arange(1 - Gw, Gw)
    biases = jnp.stack(jnp.meshgrid(pbh, pbw, indexing="ij"))  # (2, 2Gh-1, 2Gw-1)
    biases = biases.reshape(2, -1).T.astype(jnp.float32)       # (M, 2)

    coords = jnp.stack(jnp.meshgrid(jnp.arange(Gh), jnp.arange(Gw),
                                    indexing="ij"))            # (2, Gh, Gw)
    coords_flat = coords.reshape(2, -1)                        # (2, N)
    rel = coords_flat[:, :, None] - coords_flat[:, None, :]    # (2, N, N)
    rel = rel.transpose(1, 2, 0)                               # (N, N, 2)
    rel = rel.at[:, :, 0].add(Gh - 1)
    rel = rel.at[:, :, 1].add(Gw - 1)
    rel = rel.at[:, :, 0].multiply(2 * Gw - 1)
    rpi = rel.sum(-1)                                          # (N, N)

    pos = dynamic_pos_bias(biases, pos_params)                 # (M, num_heads)
    N = Gh * Gw
    rpb = pos[rpi.reshape(-1)].reshape(N, N, num_heads)
    return rpb.transpose(2, 0, 1).astype(jnp.float32)          # (nh, N, N)


# ----------------------------------------------------------------------------
# Pure-JAX f32 reference (for correctness check)
# ----------------------------------------------------------------------------
def reference_attention(x, wqkv, bqkv, wproj, bproj, rpb, num_heads, scale):
    B_, N, C = x.shape
    hd = C // num_heads
    qkv = (x @ wqkv + bqkv).reshape(B_, N, 3, num_heads, hd)
    qkv = qkv.transpose(2, 0, 3, 1, 4)                         # (3, B, nh, N, hd)
    q, k, v = qkv[0] * scale, qkv[1], qkv[2]
    attn = jnp.einsum("bhqd,bhkd->bhqk", q, k) + rpb[None]
    attn = jax.nn.softmax(attn, axis=-1)
    out = jnp.einsum("bhqk,bhkd->bhqd", attn, v)
    out = out.transpose(0, 2, 1, 3).reshape(B_, N, C)
    return out @ wproj + bproj


# ----------------------------------------------------------------------------
# Main
# ----------------------------------------------------------------------------
if __name__ == "__main__":
    dim = 32
    num_heads = 4
    group_size = (4, 4)
    B_ = 16                       # num_windows * batch
    N = group_size[0] * group_size[1]
    head_dim = dim // num_heads
    scale = head_dim ** (-0.5)
    pos_dim = (dim // 4) // 4     # DynamicPosBias pos_dim

    key = jax.random.PRNGKey(0)
    ks = jax.random.split(key, 16)

    def rnd(k, shape, s=0.1):
        return jax.random.normal(k, shape, dtype=jnp.float32) * s

    # attention parameters (stored as (in, out); PyTorch's y = x W^T + b)
    wqkv = rnd(ks[0], (dim, 3 * dim))
    bqkv = rnd(ks[1], (3 * dim,))
    wproj = rnd(ks[2], (dim, dim))
    bproj = rnd(ks[3], (dim,))

    # DynamicPosBias parameters (LayerNorm gamma=1, beta=0 as PyTorch default)
    pos_params = dict(
        w_proj=rnd(ks[4], (2, pos_dim)), b_proj=rnd(ks[5], (pos_dim,)),
        g1=jnp.ones((pos_dim,)), be1=jnp.zeros((pos_dim,)),
        w1=rnd(ks[6], (pos_dim, pos_dim)), b1=rnd(ks[7], (pos_dim,)),
        g2=jnp.ones((pos_dim,)), be2=jnp.zeros((pos_dim,)),
        w2=rnd(ks[8], (pos_dim, pos_dim)), b2=rnd(ks[9], (pos_dim,)),
        g3=jnp.ones((pos_dim,)), be3=jnp.zeros((pos_dim,)),
        w3=rnd(ks[10], (pos_dim, num_heads)), b3=rnd(ks[11], (num_heads,)),
    )

    # input: (B_, N, C)
    x = jax.random.normal(ks[12], (B_, N, dim), dtype=jnp.float32)

    # relative position bias table (tiny MLP, plain JAX) -> (nh, N, N)
    rpb = build_relative_position_bias(group_size, num_heads, pos_params)

    out = attention_pallas(x, wqkv, bqkv, wproj, bproj, rpb, num_heads, scale)
    out = jax.block_until_ready(out)

    ref = reference_attention(x, wqkv, bqkv, wproj, bproj, rpb,
                              num_heads, scale)
    ref = jax.block_until_ready(ref)

    assert out.shape == (B_, N, dim)
    max_err = float(jnp.max(jnp.abs(out - ref)))
    # bf16 MXU operands + bf16 input + approx reciprocal -> loosened tolerance.
    assert jnp.allclose(out, ref, atol=2e-2, rtol=2e-2), max_err

    # TODO(synk): attn_drop / proj_drop are identity in eval mode (p=0.0) and
    # the optional `mask` argument is None in this synthetic setup.
    print("KERNEL_OK")
</pallas_src>

<mosaic_0001>
module attributes {stable_mosaic.version = 11 : i64} {
  func.func @_attention_kernel(%arg0: i32, %arg1: memref<64x32xbf16, #tpu.memory_space<vmem>>, %arg2: memref<32x96xbf16, #tpu.memory_space<vmem>>, %arg3: memref<1x96xf32, #tpu.memory_space<vmem>>, %arg4: memref<32x32xbf16, #tpu.memory_space<vmem>>, %arg5: memref<1x32xf32, #tpu.memory_space<vmem>>, %arg6: memref<4x16x16xf32, #tpu.memory_space<vmem>>, %arg7: memref<64x32xf32, #tpu.memory_space<vmem>>) attributes {dimension_semantics = [#tpu.dimension_semantics<parallel>], iteration_bounds = array<i64: 4>, scalar_prefetch = 0 : i64, scratch_operands = 0 : i64, tpu.core_type = #tpu.core_type<tc>, window_params = [{transform_indices = @transform_0, window_bounds = array<i64: 64, 32>}, {pipeline_mode = #tpu.pipeline_mode<synchronous>, transform_indices = @transform_1, window_bounds = array<i64: 32, 96>}, {pipeline_mode = #tpu.pipeline_mode<synchronous>, transform_indices = @transform_2, window_bounds = array<i64: 1, 96>}, {pipeline_mode = #tpu.pipeline_mode<synchronous>, transform_indices = @transform_3, window_bounds = array<i64: 32, 32>}, {pipeline_mode = #tpu.pipeline_mode<synchronous>, transform_indices = @transform_4, window_bounds = array<i64: 1, 32>}, {pipeline_mode = #tpu.pipeline_mode<synchronous>, transform_indices = @transform_5, window_bounds = array<i64: 4, 16, 16>}, {transform_indices = @transform_6, window_bounds = array<i64: 64, 32>}]} {
    %c0 = arith.constant 0 : index
    %c0_0 = arith.constant 0 : index
    %0 = vector.load %arg1[%c0, %c0_0] : memref<64x32xbf16, #tpu.memory_space<vmem>>, vector<64x32xbf16>
    %c0_1 = arith.constant 0 : index
    %c0_2 = arith.constant 0 : index
    %1 = vector.load %arg2[%c0_1, %c0_2] : memref<32x96xbf16, #tpu.memory_space<vmem>>, vector<32x96xbf16>
    %cst = arith.constant dense<0.000000e+00> : vector<64x96xf32>
    %2 = tpu.matmul %0, %1, %cst {dimension_numbers = #tpu.dot_dimension_numbers<[1], [0], [0], [1], [0, 0, 1, 1], [], []>} : vector<64x32xbf16>, vector<32x96xbf16>, vector<64x96xf32> -> vector<64x96xf32>
    %c0_3 = arith.constant 0 : index
    %c0_4 = arith.constant 0 : index
    %3 = vector.load %arg3[%c0_3, %c0_4] : memref<1x96xf32, #tpu.memory_space<vmem>>, vector<1x96xf32>
    %4 = vector.broadcast %3 : vector<1x96xf32> to vector<64x96xf32>
    %5 = arith.addf %2, %4 : vector<64x96xf32>
    %6 = arith.truncf %5 : vector<64x96xf32> to vector<64x96xbf16>
    %7 = vector.extract_strided_slice %6 {offsets = [0, 0], sizes = [64, 8], strides = [1, 1]} : vector<64x96xbf16> to vector<64x8xbf16>
    %8 = vector.shape_cast %7 : vector<64x8xbf16> to vector<1x4x16x8xbf16>
    %9 = vector.extract_strided_slice %6 {offsets = [0, 8], sizes = [64, 8], strides = [1, 1]} : vector<64x96xbf16> to vector<64x8xbf16>
    %10 = vector.shape_cast %9 : vector<64x8xbf16> to vector<1x4x16x8xbf16>
    %11 = vector.extract_strided_slice %6 {offsets = [0, 16], sizes = [64, 8], strides = [1, 1]} : vector<64x96xbf16> to vector<64x8xbf16>
    %12 = vector.shape_cast %11 : vector<64x8xbf16> to vector<1x4x16x8xbf16>
    %13 = vector.extract_strided_slice %6 {offsets = [0, 24], sizes = [64, 8], strides = [1, 1]} : vector<64x96xbf16> to vector<64x8xbf16>
    %14 = vector.shape_cast %13 : vector<64x8xbf16> to vector<1x4x16x8xbf16>
    %15 = tpu.concatenate %8, %10, %12, %14 in 0 : vector<1x4x16x8xbf16>, vector<1x4x16x8xbf16>, vector<1x4x16x8xbf16>, vector<1x4x16x8xbf16> -> vector<4x4x16x8xbf16>
    %16 = vector.shape_cast %15 : vector<4x4x16x8xbf16> to vector<16x16x8xbf16>
    %17 = vector.extract_strided_slice %6 {offsets = [0, 32], sizes = [64, 8], strides = [1, 1]} : vector<64x96xbf16> to vector<64x8xbf16>
    %18 = vector.shape_cast %17 : vector<64x8xbf16> to vector<1x4x16x8xbf16>
    %19 = vector.extract_strided_slice %6 {offsets = [0, 40], sizes = [64, 8], strides = [1, 1]} : vector<64x96xbf16> to vector<64x8xbf16>
    %20 = vector.shape_cast %19 : vector<64x8xbf16> to vector<1x4x16x8xbf16>
    %21 = vector.extract_strided_slice %6 {offsets = [0, 48], sizes = [64, 8], strides = [1, 1]} : vector<64x96xbf16> to vector<64x8xbf16>
    %22 = vector.shape_cast %21 : vector<64x8xbf16> to vector<1x4x16x8xbf16>
    %23 = vector.extract_strided_slice %6 {offsets = [0, 56], sizes = [64, 8], strides = [1, 1]} : vector<64x96xbf16> to vector<64x8xbf16>
    %24 = vector.shape_cast %23 : vector<64x8xbf16> to vector<1x4x16x8xbf16>
    %25 = tpu.concatenate %18, %20, %22, %24 in 0 : vector<1x4x16x8xbf16>, vector<1x4x16x8xbf16>, vector<1x4x16x8xbf16>, vector<1x4x16x8xbf16> -> vector<4x4x16x8xbf16>
    %26 = vector.shape_cast %25 : vector<4x4x16x8xbf16> to vector<16x16x8xbf16>
    %27 = vector.extract_strided_slice %6 {offsets = [0, 64], sizes = [64, 8], strides = [1, 1]} : vector<64x96xbf16> to vector<64x8xbf16>
    %28 = vector.shape_cast %27 : vector<64x8xbf16> to vector<1x4x16x8xbf16>
    %29 = vector.extract_strided_slice %6 {offsets = [0, 72], sizes = [64, 8], strides = [1, 1]} : vector<64x96xbf16> to vector<64x8xbf16>
    %30 = vector.shape_cast %29 : vector<64x8xbf16> to vector<1x4x16x8xbf16>
    %31 = vector.extract_strided_slice %6 {offsets = [0, 80], sizes = [64, 8], strides = [1, 1]} : vector<64x96xbf16> to vector<64x8xbf16>
    %32 = vector.shape_cast %31 : vector<64x8xbf16> to vector<1x4x16x8xbf16>
    %33 = vector.extract_strided_slice %6 {offsets = [0, 88], sizes = [64, 8], strides = [1, 1]} : vector<64x96xbf16> to vector<64x8xbf16>
    %34 = vector.shape_cast %33 : vector<64x8xbf16> to vector<1x4x16x8xbf16>
    %35 = tpu.concatenate %28, %30, %32, %34 in 0 : vector<1x4x16x8xbf16>, vector<1x4x16x8xbf16>, vector<1x4x16x8xbf16>, vector<1x4x16x8xbf16> -> vector<4x4x16x8xbf16>
    %36 = vector.shape_cast %35 : vector<4x4x16x8xbf16> to vector<16x16x8xbf16>
    %cst_5 = arith.constant dense<0.000000e+00> : vector<16x16x16xf32>
    %37 = tpu.matmul %16, %26, %cst_5 {dimension_numbers = #tpu.dot_dimension_numbers<[2], [2], [1], [1], [0, 0, 0, 1, 1, 1], [0], [0]>} : vector<16x16x8xbf16>, vector<16x16x8xbf16>, vector<16x16x16xf32> -> vector<16x16x16xf32>
    %38 = vector.shape_cast %37 : vector<16x16x16xf32> to vector<4x4x16x16xf32>
    %c0_6 = arith.constant 0 : index
    %c0_7 = arith.constant 0 : index
    %c0_8 = arith.constant 0 : index
    %39 = vector.load %arg6[%c0_6, %c0_7, %c0_8] : memref<4x16x16xf32, #tpu.memory_space<vmem>>, vector<4x16x16xf32>
    %40 = vector.shape_cast %39 : vector<4x16x16xf32> to vector<4x1x16x16xf32>
    %41 = vector.broadcast %40 : vector<4x1x16x16xf32> to vector<4x4x16x16xf32>
    %42 = arith.addf %38, %41 : vector<4x4x16x16xf32>
    %cst_9 = arith.constant dense<0xFF800000> : vector<4x4x16xf32>
    %43 = vector.multi_reduction <maximumf>, %42, %cst_9 [3] : vector<4x4x16x16xf32> to vector<4x4x16xf32>
    %44 = vector.shape_cast %43 : vector<4x4x16xf32> to vector<4x4x16x1xf32>
    %45 = vector.broadcast %44 : vector<4x4x16x1xf32> to vector<4x4x16x16xf32>
    %46 = arith.subf %42, %45 : vector<4x4x16x16xf32>
    %47 = math.exp %46 : vector<4x4x16x16xf32>
    %cst_10 = arith.constant dense<0.000000e+00> : vector<4x4x16xf32>
    %48 = vector.multi_reduction <add>, %47, %cst_10 [3] : vector<4x4x16x16xf32> to vector<4x4x16xf32>
    %49 = vector.shape_cast %48 : vector<4x4x16xf32> to vector<4x4x16x1xf32>
    %50 = tpu.reciprocal %49 {approx = true} : vector<4x4x16x1xf32> -> vector<4x4x16x1xf32>
    %51 = vector.broadcast %50 : vector<4x4x16x1xf32> to vector<4x4x16x16xf32>
    %52 = arith.mulf %47, %51 : vector<4x4x16x16xf32>
    %53 = vector.shape_cast %52 : vector<4x4x16x16xf32> to vector<16x16x16xf32>
    %54 = arith.truncf %53 : vector<16x16x16xf32> to vector<16x16x16xbf16>
    %cst_11 = arith.constant dense<0.000000e+00> : vector<16x16x8xf32>
    %55 = tpu.matmul %54, %36, %cst_11 {dimension_numbers = #tpu.dot_dimension_numbers<[2], [1], [1], [2], [0, 0, 0, 1, 1, 2], [0], [0]>} : vector<16x16x16xbf16>, vector<16x16x8xbf16>, vector<16x16x8xf32> -> vector<16x16x8xf32>
    %56 = arith.truncf %55 : vector<16x16x8xf32> to vector<16x16x8xbf16>
    %57 = vector.shape_cast %56 : vector<16x16x8xbf16> to vector<4x64x8xbf16>
    %58 = vector.extract_strided_slice %57 {offsets = [0, 0, 0], sizes = [1, 64, 8], strides = [1, 1, 1]} : vector<4x64x8xbf16> to vector<1x64x8xbf16>
    %59 = vector.shape_cast %58 : vector<1x64x8xbf16> to vector<64x8xbf16>
    %60 = vector.extract_strided_slice %57 {offsets = [1, 0, 0], sizes = [1, 64, 8], strides = [1, 1, 1]} : vector<4x64x8xbf16> to vector<1x64x8xbf16>
    %61 = vector.shape_cast %60 : vector<1x64x8xbf16> to vector<64x8xbf16>
    %62 = vector.extract_strided_slice %57 {offsets = [2, 0, 0], sizes = [1, 64, 8], strides = [1, 1, 1]} : vector<4x64x8xbf16> to vector<1x64x8xbf16>
    %63 = vector.shape_cast %62 : vector<1x64x8xbf16> to vector<64x8xbf16>
    %64 = vector.extract_strided_slice %57 {offsets = [3, 0, 0], sizes = [1, 64, 8], strides = [1, 1, 1]} : vector<4x64x8xbf16> to vector<1x64x8xbf16>
    %65 = vector.shape_cast %64 : vector<1x64x8xbf16> to vector<64x8xbf16>
    %66 = tpu.concatenate %59, %61, %63, %65 in 1 : vector<64x8xbf16>, vector<64x8xbf16>, vector<64x8xbf16>, vector<64x8xbf16> -> vector<64x32xbf16>
    %c0_12 = arith.constant 0 : index
    %c0_13 = arith.constant 0 : index
    %67 = vector.load %arg4[%c0_12, %c0_13] : memref<32x32xbf16, #tpu.memory_space<vmem>>, vector<32x32xbf16>
    %cst_14 = arith.constant dense<0.000000e+00> : vector<64x32xf32>
    %68 = tpu.matmul %66, %67, %cst_14 {dimension_numbers = #tpu.dot_dimension_numbers<[1], [0], [0], [1], [0, 0, 1, 1], [], []>} : vector<64x32xbf16>, vector<32x32xbf16>, vector<64x32xf32> -> vector<64x32xf32>
    %c0_15 = arith.constant 0 : index
    %c0_16 = arith.constant 0 : index
    %69 = vector.load %arg5[%c0_15, %c0_16] : memref<1x32xf32, #tpu.memory_space<vmem>>, vector<1x32xf32>
    %70 = vector.broadcast %69 : vector<1x32xf32> to vector<64x32xf32>
    %71 = arith.addf %68, %70 : vector<64x32xf32>
    %c0_17 = arith.constant 0 : index
    %c0_18 = arith.constant 0 : index
    %72 = vector.load %arg7[%c0_17, %c0_18] : memref<64x32xf32, #tpu.memory_space<vmem>>, vector<64x32xf32>
    tpu.vector_store %arg7[%c0_17, %c0_18], %71 {strides = array<i32>} : memref<64x32xf32, #tpu.memory_space<vmem>>, vector<64x32xf32>,
    return
  }
  func.func @transform_0(%arg0: i32) -> (i32, i32) {
    %c0_i32 = arith.constant 0 : i32
    %c0_i32_0 = arith.constant 0 : i32
    return %arg0, %c0_i32 : i32, i32
  }
  func.func @transform_1(%arg0: i32) -> (i32, i32) {
    %c0_i32 = arith.constant 0 : i32
    %c0_i32_0 = arith.constant 0 : i32
    %c0_i32_1 = arith.constant 0 : i32
    return %c0_i32, %c0_i32_0 : i32, i32
  }
  func.func @transform_2(%arg0: i32) -> (i32, i32) {
    %c0_i32 = arith.constant 0 : i32
    %c0_i32_0 = arith.constant 0 : i32
    %c0_i32_1 = arith.constant 0 : i32
    return %c0_i32, %c0_i32_0 : i32, i32
  }
  func.func @transform_3(%arg0: i32) -> (i32, i32) {
    %c0_i32 = arith.constant 0 : i32
    %c0_i32_0 = arith.constant 0 : i32
    %c0_i32_1 = arith.constant 0 : i32
    return %c0_i32, %c0_i32_0 : i32, i32
  }
  func.func @transform_4(%arg0: i32) -> (i32, i32) {
    %c0_i32 = arith.constant 0 : i32
    %c0_i32_0 = arith.constant 0 : i32
    %c0_i32_1 = arith.constant 0 : i32
    return %c0_i32, %c0_i32_0 : i32, i32
  }
  func.func @transform_5(%arg0: i32) -> (i32, i32, i32) {
    %c0_i32 = arith.constant 0 : i32
    %c0_i32_0 = arith.constant 0 : i32
    %c0_i32_1 = arith.constant 0 : i32
    %c0_i32_2 = arith.constant 0 : i32
    return %c0_i32, %c0_i32_0, %c0_i32_1 : i32, i32, i32
  }
  func.func @transform_6(%arg0: i32) -> (i32, i32) {
    %c0_i32 = arith.constant 0 : i32
    %c0_i32_0 = arith.constant 0 : i32
    return %arg0, %c0_i32 : i32, i32
  }
}

</mosaic_0001>

<llo_original>
// kernel: tpu_custom_call.1
$region0: #{tpu_custom_call.1}
  #allocation0 [shape = 'u32[]', space=smem, size = 0x4, offset = 0x4, fixed_abs, tag = 'smem constant byte address 0x4 - core index']
  #allocation1 [shape = 'u32[72,128]{1,0:T(1,128)}', space=vmem, size = 0x9000, scoped, tag = 'internal scratch']
  %s0 = inlined_call_operand.vmem [shape: bf16[256,32], index: 0, kind: input, shape index: {}]
  %s1 = inlined_call_operand.vmem [shape: bf16[32,96], index: 1, kind: input, shape index: {}]
  %s2 = inlined_call_operand.vmem [shape: f32[1,96], index: 2, kind: input, shape index: {}]
  %s3 = inlined_call_operand.vmem [shape: bf16[32,32], index: 3, kind: input, shape index: {}]
  %s4 = inlined_call_operand.vmem [shape: f32[1,32], index: 4, kind: input, shape index: {}]
  %s5 = inlined_call_operand.vmem [shape: f32[4,16,16], index: 5, kind: input, shape index: {}]
  %s6 = inlined_call_operand.vmem [shape: f32[256,32], index: 6, kind: output, shape index: {}]
  %s7 = sld [smem:[#allocation0]]
  $region57: #{tpu_custom_call.1} parent=0
    _
  %s9 = ssub.s32 1, %s7
  %s10 = scalar_select 0, %s9, %s7
  loop: start=0, step=1, limit=6
  $region2: #{tpu_custom_call.1} parent=0 // loop_pre_header
    _
  $region3: #{tpu_custom_call.1} parent=0 // loop_header
    %s12 = sphi 0, %s16
    %p13 = scmp.ge.s32.totalorder %s12, 6
    %s22 = sphi 0, %s24
    %s25 = sphi 0, %s22
    %s26 = sphi 0, %s25
    %s42 = sphi 0, %s26
    %s46 = sphi 0, %s46
    %s48 = sphi 0, %s46
    %s49 = sphi 0, %s48
    %s63 = sphi 0, %s49
    %s67 = sphi 0, %s67
    %s69 = sphi 0, %s67
    %s70 = sphi 0, %s69
    %s84 = sphi 0, %s70
    %s88 = sphi 0, %s88
    %s90 = sphi 0, %s88
    %s91 = sphi 0, %s90
    %s105 = sphi 0, %s91
    %s109 = sphi 0, %s109
    %s111 = sphi 0, %s109
    %s112 = sphi 0, %s111
    %s126 = sphi 0, %s112
    %s130 = sphi 0, %s130
    %s132 = sphi 0, %s130
    %s133 = sphi 0, %s132
    %s147 = sphi 0, %s133
    %s153 = sphi 0, %s155
    %s156 = sphi 0, %s153
    %s157 = sphi 0, %s156
    %s173 = sphi 0, %s157
  $region4: #{tpu_custom_call.1} parent=0 // loop_header_branch
    %15 = sbr.rel (%p13) target = $region8
  $region5: #{tpu_custom_call.1} parent=0 // loop_body
    %s17 = ssub.s32 %s12, 1
    %s18 = ssub.s32 %s12, 2
    %s19 = sadd.s32 %s12, 1
    %s20 = ssub.s32 %s12, %s19
    %p21 = scmp.eq.s32.totalorder %s20, 0
    %s23 = sadd.s32 %s22, 1
    %s24 = scalar_select %p21, %s22, %s23
    %p27 = pneg %p21
    %p28 = scmp.eq.s32.totalorder %s12, 3
    %p29 = por %p27, %p28
    %p30 = scmp.ne.s32.totalorder %s22, %s25
    %p31 = scmp.eq.s32.totalorder %s12, 0
    %p32 = por %p30, %p31
    %p33 = scmp.ne.s32.totalorder %s22, %s25
    %p34 = scmp.eq.s32.totalorder %s17, 3
    %p35 = por %p33, %p34
    %p36 = scmp.ne.s32.totalorder %s25, %s26
    %p37 = scmp.eq.s32.totalorder %s17, 0
    %p38 = por %p36, %p37
    %p39 = scmp.ne.s32.totalorder %s25, %s26
    %p40 = scmp.eq.s32.totalorder %s18, 3
    %p41 = por %p39, %p40
    %p43 = scmp.ne.s32.totalorder %s26, %s42
    %p44 = scmp.eq.s32.totalorder %s18, 0
    %p45 = por %p43, %p44
    %s47 = sadd.s32 %s46, 1
    %p50 = scmp.eq.s32.totalorder %s12, 3
    %p51 = scmp.ne.s32.totalorder %s46, %s48
    %p52 = scmp.eq.s32.totalorder %s12, 0
    %p53 = por %p51, %p52
    %p54 = scmp.ne.s32.totalorder %s46, %s48
    %p55 = scmp.eq.s32.totalorder %s17, 3
    %p56 = por %p54, %p55
    %p57 = scmp.ne.s32.totalorder %s48, %s49
    %p58 = scmp.eq.s32.totalorder %s17, 0
    %p59 = por %p57, %p58
    %p60 = scmp.ne.s32.totalorder %s48, %s49
    %p61 = scmp.eq.s32.totalorder %s18, 3
    %p62 = por %p60, %p61
    %p64 = scmp.ne.s32.totalorder %s49, %s63
    %p65 = scmp.eq.s32.totalorder %s18, 0
    %p66 = por %p64, %p65
    %s68 = sadd.s32 %s67, 1
    %p71 = scmp.eq.s32.totalorder %s12, 3
    %p72 = scmp.ne.s32.totalorder %s67, %s69
    %p73 = scmp.eq.s32.totalorder %s12, 0
    %p74 = por %p72, %p73
    %p75 = scmp.ne.s32.totalorder %s67, %s69
    %p76 = scmp.eq.s32.totalorder %s17, 3
    %p77 = por %p75, %p76
    %p78 = scmp.ne.s32.totalorder %s69, %s70
    %p79 = scmp.eq.s32.totalorder %s17, 0
    %p80 = por %p78, %p79
    %p81 = scmp.ne.s32.totalorder %s69, %s70
    %p82 = scmp.eq.s32.totalorder %s18, 3
    %p83 = por %p81, %p82
    %p85 = scmp.ne.s32.totalorder %s70, %s84
    %p86 = scmp.eq.s32.totalorder %s18, 0
    %p87 = por %p85, %p86
    %s89 = sadd.s32 %s88, 1
    %p92 = scmp.eq.s32.totalorder %s12, 3
    %p93 = scmp.ne.s32.totalorder %s88, %s90
    %p94 = scmp.eq.s32.totalorder %s12, 0
    %p95 = por %p93, %p94
    %p96 = scmp.ne.s32.totalorder %s88, %s90
    %p97 = scmp.eq.s32.totalorder %s17, 3
    %p98 = por %p96, %p97
    %p99 = scmp.ne.s32.totalorder %s90, %s91
    %p100 = scmp.eq.s32.totalorder %s17, 0
    %p101 = por %p99, %p100
    %p102 = scmp.ne.s32.totalorder %s90, %s91
    %p103 = scmp.eq.s32.totalorder %s18, 3
    %p104 = por %p102, %p103
    %p106 = scmp.ne.s32.totalorder %s91, %s105
    %p107 = scmp.eq.s32.totalorder %s18, 0
    %p108 = por %p106, %p107
    %s110 = sadd.s32 %s109, 1
    %p113 = scmp.eq.s32.totalorder %s12, 3
    %p114 = scmp.ne.s32.totalorder %s109, %s111
    %p115 = scmp.eq.s32.totalorder %s12, 0
    %p116 = por %p114, %p115
    %p117 = scmp.ne.s32.totalorder %s109, %s111
    %p118 = scmp.eq.s32.totalorder %s17, 3
    %p119 = por %p117, %p118
    %p120 = scmp.ne.s32.totalorder %s111, %s112
    %p121 = scmp.eq.s32.totalorder %s17, 0
    %p122 = por %p120, %p121
    %p123 = scmp.ne.s32.totalorder %s111, %s112
    %p124 = scmp.eq.s32.totalorder %s18, 3
    %p125 = por %p123, %p124
    %p127 = scmp.ne.s32.totalorder %s112, %s126
    %p128 = scmp.eq.s32.totalorder %s18, 0
    %p129 = por %p127, %p128
    %s131 = sadd.s32 %s130, 1
    %p134 = scmp.eq.s32.totalorder %s12, 3
    %p135 = scmp.ne.s32.totalorder %s130, %s132
    %p136 = scmp.eq.s32.totalorder %s12, 0
    %p137 = por %p135, %p136
    %p138 = scmp.ne.s32.totalorder %s130, %s132
    %p139 = scmp.eq.s32.totalorder %s17, 3
    %p140 = por %p138, %p139
    %p141 = scmp.ne.s32.totalorder %s132, %s133
    %p142 = scmp.eq.s32.totalorder %s17, 0
    %p143 = por %p141, %p142
    %p144 = scmp.ne.s32.totalorder %s132, %s133
    %p145 = scmp.eq.s32.totalorder %s18, 3
    %p146 = por %p144, %p145
    %p148 = scmp.ne.s32.totalorder %s133, %s147
    %p149 = scmp.eq.s32.totalorder %s18, 0
    %p150 = por %p148, %p149
    %s151 = ssub.s32 %s12, %s19
    %p152 = scmp.eq.s32.totalorder %s151, 0
    %s154 = sadd.s32 %s153, 1
    %s155 = scalar_select %p152, %s153, %s154
    %p158 = pneg %p152
    %p159 = scmp.eq.s32.totalorder %s12, 3
    %p160 = por %p158, %p159
    %p161 = scmp.ne.s32.totalorder %s153, %s156
    %p162 = scmp.eq.s32.totalorder %s12, 0
    %p163 = por %p161, %p162
    %p164 = scmp.ne.s32.totalorder %s153, %s156
    %p165 = scmp.eq.s32.totalorder %s17, 3
    %p166 = por %p164, %p165
    %p167 = scmp.ne.s32.totalorder %s156, %s157
    %p168 = scmp.eq.s32.totalorder %s17, 0
    %p169 = por %p167, %p168
    %p170 = scmp.ne.s32.totalorder %s156, %s157
    %p171 = scmp.eq.s32.totalorder %s18, 3
    %p172 = por %p170, %p171
    %p174 = scmp.ne.s32.totalorder %s157, %s173
    %p175 = scmp.eq.s32.totalorder %s18, 0
    %p176 = por %p174, %p175
    %p177 = scmp.le.s32.totalorder 1, %s12
    %p178 = scmp.lt.s32.totalorder %s12, 5
    %p179 = pnand %p177, %p178
    %p180 = pneg %p179
    // Predicated region
    $region9: #{tpu_custom_call.1} parent=5 // pred_check
      _
    $region10: #{tpu_custom_call.1} parent=5 // pred_check_branch
      %182 = sbr.rel (%p179) target = $region12
    $region11: #{tpu_custom_call.1} parent=5 // pred_region
      %s183 = ssub.s32 %s12, 1
      // Predicated region
      $region13: #{tpu_custom_call.1} parent=11 // pred_check
        %p184 = pneg %p59
      $region14: #{tpu_custom_call.1} parent=11 // pred_check_branch
        %186 = sbr.rel (%p184) target = $region16
      $region15: #{tpu_custom_call.1} parent=11 // pred_region
        _
      $region16: #{tpu_custom_call.1} parent=11 // pred_fallthru
        _
      // Predicated region
      $region17: #{tpu_custom_call.1} parent=11 // pred_check
        %p187 = pneg %p80
      $region18: #{tpu_custom_call.1} parent=11 // pred_check_branch
        %189 = sbr.rel (%p187) target = $region20
      $region19: #{tpu_custom_call.1} parent=11 // pred_region
        _
      $region20: #{tpu_custom_call.1} parent=11 // pred_fallthru
        _
      // Predicated region
      $region21: #{tpu_custom_call.1} parent=11 // pred_check
        %p190 = pneg %p101
      $region22: #{tpu_custom_call.1} parent=11 // pred_check_branch
        %192 = sbr.rel (%p190) target = $region24
      $region23: #{tpu_custom_call.1} parent=11 // pred_region
        _
      $region24: #{tpu_custom_call.1} parent=11 // pred_fallthru
        _
      // Predicated region
      $region25: #{tpu_custom_call.1} parent=11 // pred_check
        %p193 = pneg %p122
      $region26: #{tpu_custom_call.1} parent=11 // pred_check_branch
        %195 = sbr.rel (%p193) target = $region28
      $region27: #{tpu_custom_call.1} parent=11 // pred_region
        _
      $region28: #{tpu_custom_call.1} parent=11 // pred_fallthru
        _
      // Predicated region
      $region29: #{tpu_custom_call.1} parent=11 // pred_check
        %p196 = pneg %p143
      $region30: #{tpu_custom_call.1} parent=11 // pred_check_branch
        %198 = sbr.rel (%p196) target = $region32
      $region31: #{tpu_custom_call.1} parent=11 // pred_region
        _
      $region32: #{tpu_custom_call.1} parent=11 // pred_fallthru
        _
    $region12: #{tpu_custom_call.1} parent=5 // pred_fallthru
      _
    %p199 = scmp.lt.s32.totalorder %s12, 4
    // Predicated region
    $region33: #{tpu_custom_call.1} parent=5 // pred_check
      %p200 = pneg %p199
    $region34: #{tpu_custom_call.1} parent=5 // pred_check_branch
      %202 = sbr.rel (%p200) target = $region36
    $region35: #{tpu_custom_call.1} parent=5 // pred_region
      // Predicated region
      $region37: #{tpu_custom_call.1} parent=35 // pred_check
        %p203 = pneg %p32
      $region38: #{tpu_custom_call.1} parent=35 // pred_check_branch
        %205 = sbr.rel (%p203) target = $region40
      $region39: #{tpu_custom_call.1} parent=35 // pred_region
        %s206 = smul.u32 8, %s12
        %p207 = scmp.lt.s32.totalorder %s206, 31
        %s208 = scalar_select %p207, %s206, 31
        %s209 = smul.addr %s208, 4
        %s210 = scalar_lea.vmem %s0, %s209
        %s211 = smul.u32 8, %s12
      $region40: #{tpu_custom_call.1} parent=35 // pred_fallthru
        _
    $region36: #{tpu_custom_call.1} parent=5 // pred_fallthru
      _
    %p212 = scmp.le.s32.totalorder 1, %s12
    %p213 = scmp.lt.s32.totalorder %s12, 5
    %p214 = pnand %p212, %p213
    %p215 = pneg %p214
    // Predicated region
    $region41: #{tpu_custom_call.1} parent=5 // pred_check
      _
    $region42: #{tpu_custom_call.1} parent=5 // pred_check_branch
      %217 = sbr.rel (%p214) target = $region44
    $region43: #{tpu_custom_call.1} parent=5 // pred_region
      %s218 = ssub.s32 %s12, 1
      %s219 = smul.u32 8, %s17
      %p220 = scmp.lt.s32.totalorder %s219, 31
      %s221 = scalar_select %p220, %s219, 31
      %s222 = smul.addr %s221, 4
      %s223 = scalar_lea.vmem %s0, %s222
      %p224 = pneg %p38
      %p225 = pneg %p35
      %p226 = pneg %p59
      %p227 = pneg %p56
      %p228 = pneg %p80
      %p229 = pneg %p77
      %p230 = pneg %p101
      %p231 = pneg %p98
      %p232 = pneg %p122
      %p233 = pneg %p119
      %p234 = pneg %p143
      %p235 = pneg %p140
      %p236 = pneg %p169
      %p237 = pneg %p166
      %s238 = smul.u32 8, %s17
      %p239 = scmp.lt.s32.totalorder %s238, 31
      %s240 = scalar_select %p239, %s238, 31
      %s241 = smul.addr %s240, 8
      %s242 = scalar_lea.vmem %s6, %s241
      %s243 = smul.u32 8, %s17
      %p244 = scmp.lt.s32.totalorder %s243, 31
      %s245 = scalar_select %p244, %s243, 31
      %s246 = smul.addr %s245, 4
      %s247 = scalar_lea.vmem %s0, %s246
      %s248 = smul.u32 8, %s17
      %s249 = smul.u32 8, %s17
      %p250 = scmp.lt.s32.totalorder %s249, 31
      %s251 = scalar_select %p250, %s249, 31
      %s252 = smul.addr %s251, 8
      %s253 = scalar_lea.vmem %s6, %s252
      %s254 = smul.u32 8, %s17
      %v256 = vld [vmem:[%s247] sm:$0xf]
      %v257 = vld [vmem:[%s247 + $0x4] sm:$0xf]
      %v258 = vld [vmem:[%s247 + $0x8] sm:$0xf]
      %v259 = vld [vmem:[%s247 + $0xc] sm:$0xf]
      %v260 = vld [vmem:[%s247 + $0x10] sm:$0xf]
      %v261 = vld [vmem:[%s247 + $0x14] sm:$0xf]
      %v262 = vld [vmem:[%s247 + $0x18] sm:$0xf]
      %v263 = vld [vmem:[%s247 + $0x1c] sm:$0xf]
      %v264 = vld [vmem:[%s1] sm:$0xf]
      %v265 = vld [vmem:[%s1 + $0x4] sm:$0xf]
      %v266 = vld [vmem:[%s1 + $0x8] sm:$0xf]
      %v267 = vld [vmem:[%s1 + $0xc] sm:$0xf]
      %v268 = vld [vmem:[%s2] sm:$0x1]
      %v270 = vperm.slane %v268, 0
      %v280 = vunpack.c.l.b16 %v256
      %v281 = vunpack.c.l.b16 %v257
      %v282 = vunpack.c.l.b16 %v258
      %v283 = vunpack.c.l.b16 %v259
      %v284 = vunpack.c.l.b16 %v260
      %v285 = vunpack.c.l.b16 %v261
      %v286 = vunpack.c.l.b16 %v262
      %v287 = vunpack.c.l.b16 %v263
      %v288 = vpack.c.b16 %v281, %v280
      %v289 = vpack.c.b16 %v283, %v282
      %v290 = vpack.c.b16 %v285, %v284
      %v291 = vpack.c.b16 %v287, %v286
      %v296 = vunpack.c.l.b16 %v264
      %v297 = vunpack.c.l.b16 %v265
      %v298 = vunpack.c.l.b16 %v266
      %v299 = vunpack.c.l.b16 %v267
      %v300 = vpack.c.b16 %v297, %v296
      %v301 = vpack.c.b16 %v299, %v298
      %vm304 = vcmask 261120
      %v306 = vsel %vm304, %v288, 0
      %v309 = vsel %vm304, %v289, 0
      %v312 = vsel %vm304, %v290, 0
      %v315 = vsel %vm304, %v291, 0
      %317 = vmatpush.bf16.msra.mxu0 0
      %318 = vmatpush.bf16.msra.mxu0 0
      %319 = vmatpush.bf16.msra.mxu0 0
      %320 = vmatpush.bf16.msra.mxu0 0
      %321 = vmatpush.bf16.msra.mxu0 0
      %322 = vmatpush.bf16.msra.mxu0 0
      %323 = vmatpush.bf16.msra.mxu0 %v301
      %324 = vmatpush.bf16.msra.mxu0 %v300
      %325 = vmatmul.bf16.gmra.mxu0 %v306
      %v326 = vpop.f32.mrf.mxu0
      %v327 = vadd.f32 %v270, %v326
      %v328 = vpop.f32.mrf.mxu0
      %v329 = vadd.f32 %v270, %v328
      %330 = vmatmul.bf16.gmra.mxu0 %v309
      %v331 = vpop.f32.mrf.mxu0
      %v332 = vadd.f32 %v270, %v331
      %v333 = vpop.f32.mrf.mxu0
      %v334 = vadd.f32 %v270, %v333
      %335 = vmatmul.bf16.gmra.mxu0 %v312
      %v336 = vpop.f32.mrf.mxu0
      %v337 = vadd.f32 %v270, %v336
      %v338 = vpop.f32.mrf.mxu0
      %v339 = vadd.f32 %v270, %v338
      %340 = vmatmul.bf16.gmra.mxu0 %v315
      %v341 = vpop.f32.mrf.mxu0
      %v342 = vadd.f32 %v270, %v341
      %v343 = vpop.f32.mrf.mxu0
      %v344 = vadd.f32 %v270, %v343
      %345 = vdwg.mxu0
      %v346 = vpack.c.bf16 %v327, %v327
      %v347 = vpack.c.bf16 %v329, %v329
      %v348 = vpack.c.bf16 %v332, %v332
      %v349 = vpack.c.bf16 %v334, %v334
      %v350 = vpack.c.bf16 %v337, %v337
      %v351 = vpack.c.bf16 %v339, %v339
      %v352 = vpack.c.bf16 %v342, %v342
      %v353 = vpack.c.bf16 %v344, %v344
      %362 = vrot.lane.b32.xlu0 %v346, 120
      %v363 = vpop.permute.xlu0 %362
      %364 = vrot.lane.b32.xlu0 %v347, 120
      %v365 = vpop.permute.xlu0 %364
      %366 = vrot.lane.b32.xlu0 %v348, 120
      %v367 = vpop.permute.xlu0 %366
      %368 = vrot.lane.b32.xlu0 %v349, 120
      %v369 = vpop.permute.xlu0 %368
      %370 = vrot.lane.b32.xlu0 %v350, 120
      %v371 = vpop.permute.xlu0 %370
      %372 = vrot.lane.b32.xlu0 %v351, 120
      %v373 = vpop.permute.xlu0 %372
      %374 = vrot.lane.b32.xlu0 %v352, 120
      %v375 = vpop.permute.xlu0 %374
      %376 = vrot.lane.b32.xlu0 %v353, 120
      %v377 = vpop.permute.xlu0 %376
      %378 = vrot.lane.b32.xlu0 %v346, 112
      %v379 = vpop.permute.xlu0 %378
      %380 = vrot.lane.b32.xlu0 %v347, 112
      %v381 = vpop.permute.xlu0 %380
      %382 = vrot.lane.b32.xlu0 %v348, 112
      %v383 = vpop.permute.xlu0 %382
      %384 = vrot.lane.b32.xlu0 %v349, 112
      %v385 = vpop.permute.xlu0 %384
      %386 = vrot.lane.b32.xlu0 %v350, 112
      %v387 = vpop.permute.xlu0 %386
      %388 = vrot.lane.b32.xlu0 %v351, 112
      %v389 = vpop.permute.xlu0 %388
      %390 = vrot.lane.b32.xlu0 %v352, 112
      %v391 = vpop.permute.xlu0 %390
      %392 = vrot.lane.b32.xlu0 %v353, 112
      %v393 = vpop.permute.xlu0 %392
      %394 = vrot.lane.b32.xlu0 %v346, 104
      %v395 = vpop.permute.xlu0 %394
      %396 = vrot.lane.b32.xlu0 %v347, 104
      %v397 = vpop.permute.xlu0 %396
      %398 = vrot.lane.b32.xlu0 %v348, 104
      %v399 = vpop.permute.xlu0 %398
      %400 = vrot.lane.b32.xlu0 %v349, 104
      %v401 = vpop.permute.xlu0 %400
      %402 = vrot.lane.b32.xlu0 %v350, 104
      %v403 = vpop.permute.xlu0 %402
      %404 = vrot.lane.b32.xlu0 %v351, 104
      %v405 = vpop.permute.xlu0 %404
      %406 = vrot.lane.b32.xlu0 %v352, 104
      %v407 = vpop.permute.xlu0 %406
      %408 = vrot.lane.b32.xlu0 %v353, 104
      %v409 = vpop.permute.xlu0 %408
      %v410 = vunpack.c.l.b16 %v346
      %v411 = vunpack.c.l.b16 %v347
      %v412 = vpack.c.b16 %v411, %v410
      %413 = vrot.lane.b32.xlu0 %v412, 96
      %v414 = vpop.permute.xlu0 %413
      %vm415 = vcmask 64512
      %v417 = vsel %vm415, %v412, 0
      %v420 = vsel %vm415, %v414, 0
      %422 = vmatpush.bf16.xpose.msra.mxu0 0
      %423 = vmatpush.bf16.xpose.msra.mxu0 0
      %424 = vmatpush.bf16.xpose.msra.mxu0 0
      %425 = vmatpush.bf16.xpose.msra.mxu0 0
      %426 = vmatpush.bf16.xpose.msra.mxu0 0
      %427 = vmatpush.bf16.xpose.msra.mxu0 0
      %428 = vmatpush.bf16.xpose.msra.mxu0 0
      %429 = vmatpush.bf16.xpose.msra.mxu0 %v420
      %430 = vmatmul.bf16.gmra.mxu0 %v417
      %v431 = vpop.f32.mrf.mxu0
      %v432 = vadd.f32 0.0, %v431
      %v433 = vpop.f32.mrf.mxu0
      %v434 = vadd.f32 0.0, %v433
      %435 = vdwg.mxu0
      %v436 = vunpack.c.l.b16 %v348
      %v437 = vunpack.c.l.b16 %v349
      %v438 = vpack.c.b16 %v437, %v436
      %439 = vrot.lane.b32.xlu0 %v438, 96
      %v440 = vpop.permute.xlu0 %439
      %v442 = vsel %vm415, %v438, 0
      %v445 = vsel %vm415, %v440, 0
      %447 = vmatpush.bf16.xpose.msra.mxu0 0
      %448 = vmatpush.bf16.xpose.msra.mxu0 0
      %449 = vmatpush.bf16.xpose.msra.mxu0 0
      %450 = vmatpush.bf16.xpose.msra.mxu0 0
      %451 = vmatpush.bf16.xpose.msra.mxu0 0
      %452 = vmatpush.bf16.xpose.msra.mxu0 0
      %453 = vmatpush.bf16.xpose.msra.mxu0 0
      %454 = vmatpush.bf16.xpose.msra.mxu0 %v445
      %455 = vmatmul.bf16.gmra.mxu0 %v442
      %v456 = vpop.f32.mrf.mxu0
      %v457 = vadd.f32 0.0, %v456
      %v458 = vpop.f32.mrf.mxu0
      %v459 = vadd.f32 0.0, %v458
      %460 = vdwg.mxu0
      %v461 = vunpack.c.l.b16 %v350
      %v462 = vunpack.c.l.b16 %v351
      %v463 = vpack.c.b16 %v462, %v461
      %464 = vrot.lane.b32.xlu0 %v463, 96
      %v465 = vpop.permute.xlu0 %464
      %v467 = vsel %vm415, %v463, 0
      %v470 = vsel %vm415, %v465, 0
      %472 = vmatpush.bf16.xpose.msra.mxu0 0
      %473 = vmatpush.bf16.xpose.msra.mxu0 0
      %474 = vmatpush.bf16.xpose.msra.mxu0 0
      %475 = vmatpush.bf16.xpose.msra.mxu0 0
      %476 = vmatpush.bf16.xpose.msra.mxu0 0
      %477 = vmatpush.bf16.xpose.msra.mxu0 0
      %478 = vmatpush.bf16.xpose.msra.mxu0 0
      %479 = vmatpush.bf16.xpose.msra.mxu0 %v470
      %480 = vmatmul.bf16.gmra.mxu0 %v467
      %v481 = vpop.f32.mrf.mxu0
      %v482 = vadd.f32 0.0, %v481
      %v483 = vpop.f32.mrf.mxu0
      %v484 = vadd.f32 0.0, %v483
      %485 = vdwg.mxu0
      %v486 = vunpack.c.l.b16 %v352
      %v487 = vunpack.c.l.b16 %v353
      %v488 = vpack.c.b16 %v487, %v486
      %489 = vrot.lane.b32.xlu0 %v488, 96
      %v490 = vpop.permute.xlu0 %489
      %v492 = vsel %vm415, %v488, 0
      %v495 = vsel %vm415, %v490, 0
      %497 = vmatpush.bf16.xpose.msra.mxu0 0
      %498 = vmatpush.bf16.xpose.msra.mxu0 0
      %499 = vmatpush.bf16.xpose.msra.mxu0 0
      %500 = vmatpush.bf16.xpose.msra.mxu0 0
      %501 = vmatpush.bf16.xpose.msra.mxu0 0
      %502 = vmatpush.bf16.xpose.msra.mxu0 0
      %503 = vmatpush.bf16.xpose.msra.mxu0 0
      %504 = vmatpush.bf16.xpose.msra.mxu0 %v495
      %505 = vmatmul.bf16.gmra.mxu0 %v492
      %v506 = vpop.f32.mrf.mxu0
      %v507 = vadd.f32 0.0, %v506
      %v508 = vpop.f32.mrf.mxu0
      %v509 = vadd.f32 0.0, %v508
      %510 = vdwg.mxu0
      %v511 = vunpack.c.l.b16 %v363
      %v512 = vunpack.c.l.b16 %v365
      %v513 = vpack.c.b16 %v512, %v511
      %514 = vrot.lane.b32.xlu0 %v513, 96
      %v515 = vpop.permute.xlu0 %514
      %v517 = vsel %vm415, %v513, 0
      %v520 = vsel %vm415, %v515, 0
      %522 = vmatpush.bf16.xpose.msra.mxu0 0
      %523 = vmatpush.bf16.xpose.msra.mxu0 0
      %524 = vmatpush.bf16.xpose.msra.mxu0 0
      %525 = vmatpush.bf16.xpose.msra.mxu0 0
      %526 = vmatpush.bf16.xpose.msra.mxu0 0
      %527 = vmatpush.bf16.xpose.msra.mxu0 0
      %528 = vmatpush.bf16.xpose.msra.mxu0 0
      %529 = vmatpush.bf16.xpose.msra.mxu0 %v520
      %530 = vmatmul.bf16.gmra.mxu0 %v517
      %v531 = vpop.f32.mrf.mxu0
      %v532 = vadd.f32 0.0, %v531
      %v533 = vpop.f32.mrf.mxu0
      %v534 = vadd.f32 0.0, %v533
      %535 = vdwg.mxu0
      %v536 = vunpack.c.l.b16 %v367
      %v537 = vunpack.c.l.b16 %v369
      %v538 = vpack.c.b16 %v537, %v536
      %539 = vrot.lane.b32.xlu0 %v538, 96
      %v540 = vpop.permute.xlu0 %539
      %v542 = vsel %vm415, %v538, 0
      %v545 = vsel %vm415, %v540, 0
      %547 = vmatpush.bf16.xpose.msra.mxu0 0
      %548 = vmatpush.bf16.xpose.msra.mxu0 0
      %549 = vmatpush.bf16.xpose.msra.mxu0 0
      %550 = vmatpush.bf16.xpose.msra.mxu0 0
      %551 = vmatpush.bf16.xpose.msra.mxu0 0
      %552 = vmatpush.bf16.xpose.msra.mxu0 0
      %553 = vmatpush.bf16.xpose.msra.mxu0 0
      %554 = vmatpush.bf16.xpose.msra.mxu0 %v545
      %555 = vmatmul.bf16.gmra.mxu0 %v542
      %v556 = vpop.f32.mrf.mxu0
      %v557 = vadd.f32 0.0, %v556
      %v558 = vpop.f32.mrf.mxu0
      %v559 = vadd.f32 0.0, %v558
      %560 = vdwg.mxu0
      %v561 = vunpack.c.l.b16 %v371
      %v562 = vunpack.c.l.b16 %v373
      %v563 = vpack.c.b16 %v562, %v561
      %564 = vrot.lane.b32.xlu0 %v563, 96
      %v565 = vpop.permute.xlu0 %564
      %v567 = vsel %vm415, %v563, 0
      %v570 = vsel %vm415, %v565, 0
      %572 = vmatpush.bf16.xpose.msra.mxu0 0
      %573 = vmatpush.bf16.xpose.msra.mxu0 0
      %574 = vmatpush.bf16.xpose.msra.mxu0 0
      %575 = vmatpush.bf16.xpose.msra.mxu0 0
      %576 = vmatpush.bf16.xpose.msra.mxu0 0
      %577 = vmatpush.bf16.xpose.msra.mxu0 0
      %578 = vmatpush.bf16.xpose.msra.mxu0 0
      %579 = vmatpush.bf16.xpose.msra.mxu0 %v570
      %580 = vmatmul.bf16.gmra.mxu0 %v567
      %v581 = vpop.f32.mrf.mxu0
      %v582 = vadd.f32 0.0, %v581
      %v583 = vpop.f32.mrf.mxu0
      %v584 = vadd.f32 0.0, %v583
      %585 = vdwg.mxu0
      %v586 = vunpack.c.l.b16 %v375
      %v587 = vunpack.c.l.b16 %v377
      %v588 = vpack.c.b16 %v587, %v586
      %589 = vrot.lane.b32.xlu0 %v588, 96
      %v590 = vpop.permute.xlu0 %589
      %v592 = vsel %vm415, %v588, 0
      %v595 = vsel %vm415, %v590, 0
      %597 = vmatpush.bf16.xpose.msra.mxu0 0
      %598 = vmatpush.bf16.xpose.msra.mxu0 0
      %599 = vmatpush.bf16.xpose.msra.mxu0 0
      %600 = vmatpush.bf16.xpose.msra.mxu0 0
      %601 = vmatpush.bf16.xpose.msra.mxu0 0
      %602 = vmatpush.bf16.xpose.msra.mxu0 0
      %603 = vmatpush.bf16.xpose.msra.mxu0 0
      %604 = vmatpush.bf16.xpose.msra.mxu0 %v595
      %605 = vmatmul.bf16.gmra.mxu0 %v592
      %v606 = vpop.f32.mrf.mxu0
      %v607 = vadd.f32 0.0, %v606
      %v608 = vpop.f32.mrf.mxu0
      %v609 = vadd.f32 0.0, %v608
      %610 = vdwg.mxu0
      %v611 = vunpack.c.l.b16 %v379
      %v612 = vunpack.c.l.b16 %v381
      %v613 = vpack.c.b16 %v612, %v611
      %614 = vrot.lane.b32.xlu0 %v613, 96
      %v615 = vpop.permute.xlu0 %614
      %v617 = vsel %vm415, %v613, 0
      %v620 = vsel %vm415, %v615, 0
      %622 = vmatpush.bf16.xpose.msra.mxu0 0
      %623 = vmatpush.bf16.xpose.msra.mxu0 0
      %624 = vmatpush.bf16.xpose.msra.mxu0 0
      %625 = vmatpush.bf16.xpose.msra.mxu0 0
      %626 = vmatpush.bf16.xpose.msra.mxu0 0
      %627 = vmatpush.bf16.xpose.msra.mxu0 0
      %628 = vmatpush.bf16.xpose.msra.mxu0 0
      %629 = vmatpush.bf16.xpose.msra.mxu0 %v620
      %630 = vmatmul.bf16.gmra.mxu0 %v617
      %v631 = vpop.f32.mrf.mxu0
      %v632 = vadd.f32 0.0, %v631
      %v633 = vpop.f32.mrf.mxu0
      %v634 = vadd.f32 0.0, %v633
      %635 = vdwg.mxu0
      %v636 = vunpack.c.l.b16 %v383
      %v637 = vunpack.c.l.b16 %v385
      %v638 = vpack.c.b16 %v637, %v636
      %639 = vrot.lane.b32.xlu0 %v638, 96
      %v640 = vpop.permute.xlu0 %639
      %v642 = vsel %vm415, %v638, 0
      %v645 = vsel %vm415, %v640, 0
      %647 = vmatpush.bf16.xpose.msra.mxu0 0
      %648 = vmatpush.bf16.xpose.msra.mxu0 0
      %649 = vmatpush.bf16.xpose.msra.mxu0 0
      %650 = vmatpush.bf16.xpose.msra.mxu0 0
      %651 = vmatpush.bf16.xpose.msra.mxu0 0
      %652 = vmatpush.bf16.xpose.msra.mxu0 0
      %653 = vmatpush.bf16.xpose.msra.mxu0 0
      %654 = vmatpush.bf16.xpose.msra.mxu0 %v645
      %655 = vmatmul.bf16.gmra.mxu0 %v642
      %v656 = vpop.f32.mrf.mxu0
      %v657 = vadd.f32 0.0, %v656
      %v658 = vpop.f32.mrf.mxu0
      %v659 = vadd.f32 0.0, %v658
      %660 = vdwg.mxu0
      %v661 = vunpack.c.l.b16 %v387
      %v662 = vunpack.c.l.b16 %v389
      %v663 = vpack.c.b16 %v662, %v661
      %664 = vrot.lane.b32.xlu0 %v663, 96
      %v665 = vpop.permute.xlu0 %664
      %v667 = vsel %vm415, %v663, 0
      %v670 = vsel %vm415, %v665, 0
      %672 = vmatpush.bf16.xpose.msra.mxu0 0
      %673 = vmatpush.bf16.xpose.msra.mxu0 0
      %674 = vmatpush.bf16.xpose.msra.mxu0 0
      %675 = vmatpush.bf16.xpose.msra.mxu0 0
      %676 = vmatpush.bf16.xpose.msra.mxu0 0
      %677 = vmatpush.bf16.xpose.msra.mxu0 0
      %678 = vmatpush.bf16.xpose.msra.mxu0 0
      %679 = vmatpush.bf16.xpose.msra.mxu0 %v670
      %680 = vmatmul.bf16.gmra.mxu0 %v667
      %v681 = vpop.f32.mrf.mxu0
      %v682 = vadd.f32 0.0, %v681
      %v683 = vpop.f32.mrf.mxu0
      %v684 = vadd.f32 0.0, %v683
      %685 = vdwg.mxu0
      %v686 = vunpack.c.l.b16 %v391
      %v687 = vunpack.c.l.b16 %v393
      %v688 = vpack.c.b16 %v687, %v686
      %689 = vrot.lane.b32.xlu0 %v688, 96
      %v690 = vpop.permute.xlu0 %689
      %v692 = vsel %vm415, %v688, 0
      %v695 = vsel %vm415, %v690, 0
      %697 = vmatpush.bf16.xpose.msra.mxu0 0
      %698 = vmatpush.bf16.xpose.msra.mxu0 0
      %699 = vmatpush.bf16.xpose.msra.mxu0 0
      %700 = vmatpush.bf16.xpose.msra.mxu0 0
      %701 = vmatpush.bf16.xpose.msra.mxu0 0
      %702 = vmatpush.bf16.xpose.msra.mxu0 0
      %703 = vmatpush.bf16.xpose.msra.mxu0 0
      %704 = vmatpush.bf16.xpose.msra.mxu0 %v695
      %705 = vmatmul.bf16.gmra.mxu0 %v692
      %v706 = vpop.f32.mrf.mxu0
      %v707 = vadd.f32 0.0, %v706
      %v708 = vpop.f32.mrf.mxu0
      %v709 = vadd.f32 0.0, %v708
      %710 = vdwg.mxu0
      %v711 = vunpack.c.l.b16 %v395
      %v712 = vunpack.c.l.b16 %v397
      %v713 = vpack.c.b16 %v712, %v711
      %714 = vrot.lane.b32.xlu0 %v713, 96
      %v715 = vpop.permute.xlu0 %714
      %v717 = vsel %vm415, %v713, 0
      %v720 = vsel %vm415, %v715, 0
      %722 = vmatpush.bf16.xpose.msra.mxu0 0
      %723 = vmatpush.bf16.xpose.msra.mxu0 0
      %724 = vmatpush.bf16.xpose.msra.mxu0 0
      %725 = vmatpush.bf16.xpose.msra.mxu0 0
      %726 = vmatpush.bf16.xpose.msra.mxu0 0
      %727 = vmatpush.bf16.xpose.msra.mxu0 0
      %728 = vmatpush.bf16.xpose.msra.mxu0 0
      %729 = vmatpush.bf16.xpose.msra.mxu0 %v720
      %730 = vmatmul.bf16.gmra.mxu0 %v717
      %v731 = vpop.f32.mrf.mxu0
      %v732 = vadd.f32 0.0, %v731
      %v733 = vpop.f32.mrf.mxu0
      %v734 = vadd.f32 0.0, %v733
      %735 = vdwg.mxu0
      %v736 = vunpack.c.l.b16 %v399
      %v737 = vunpack.c.l.b16 %v401
      %v738 = vpack.c.b16 %v737, %v736
      %739 = vrot.lane.b32.xlu0 %v738, 96
      %v740 = vpop.permute.xlu0 %739
      %v742 = vsel %vm415, %v738, 0
      %v745 = vsel %vm415, %v740, 0
      %747 = vmatpush.bf16.xpose.msra.mxu0 0
      %748 = vmatpush.bf16.xpose.msra.mxu0 0
      %749 = vmatpush.bf16.xpose.msra.mxu0 0
      %750 = vmatpush.bf16.xpose.msra.mxu0 0
      %751 = vmatpush.bf16.xpose.msra.mxu0 0
      %752 = vmatpush.bf16.xpose.msra.mxu0 0
      %753 = vmatpush.bf16.xpose.msra.mxu0 0
      %754 = vmatpush.bf16.xpose.msra.mxu0 %v745
      %755 = vmatmul.bf16.gmra.mxu0 %v742
      %v756 = vpop.f32.mrf.mxu0
      %v757 = vadd.f32 0.0, %v756
      %v758 = vpop.f32.mrf.mxu0
      %v759 = vadd.f32 0.0, %v758
      %760 = vdwg.mxu0
      %v761 = vunpack.c.l.b16 %v403
      %v762 = vunpack.c.l.b16 %v405
      %v763 = vpack.c.b16 %v762, %v761
      %764 = vrot.lane.b32.xlu0 %v763, 96
      %v765 = vpop.permute.xlu0 %764
      %v767 = vsel %vm415, %v763, 0
      %v770 = vsel %vm415, %v765, 0
      %772 = vmatpush.bf16.xpose.msra.mxu0 0
      %773 = vmatpush.bf16.xpose.msra.mxu0 0
      %774 = vmatpush.bf16.xpose.msra.mxu0 0
      %775 = vmatpush.bf16.xpose.msra.mxu0 0
      %776 = vmatpush.bf16.xpose.msra.mxu0 0
      %777 = vmatpush.bf16.xpose.msra.mxu0 0
      %778 = vmatpush.bf16.xpose.msra.mxu0 0
      %779 = vmatpush.bf16.xpose.msra.mxu0 %v770
      %780 = vmatmul.bf16.gmra.mxu0 %v767
      %v781 = vpop.f32.mrf.mxu0
      %v782 = vadd.f32 0.0, %v781
      %v783 = vpop.f32.mrf.mxu0
      %v784 = vadd.f32 0.0, %v783
      %785 = vdwg.mxu0
      %v786 = vunpack.c.l.b16 %v407
      %v787 = vunpack.c.l.b16 %v409
      %v788 = vpack.c.b16 %v787, %v786
      %789 = vrot.lane.b32.xlu0 %v788, 96
      %v790 = vpop.permute.xlu0 %789
      %v792 = vsel %vm415, %v788, 0
      %v795 = vsel %vm415, %v790, 0
      %797 = vmatpush.bf16.xpose.msra.mxu0 0
      %798 = vmatpush.bf16.xpose.msra.mxu0 0
      %799 = vmatpush.bf16.xpose.msra.mxu0 0
      %800 = vmatpush.bf16.xpose.msra.mxu0 0
      %801 = vmatpush.bf16.xpose.msra.mxu0 0
      %802 = vmatpush.bf16.xpose.msra.mxu0 0
      %803 = vmatpush.bf16.xpose.msra.mxu0 0
      %804 = vmatpush.bf16.xpose.msra.mxu0 %v795
      %805 = vmatmul.bf16.gmra.mxu0 %v792
      %v806 = vpop.f32.mrf.mxu0
      %v807 = vadd.f32 0.0, %v806
      %v808 = vpop.f32.mrf.mxu0
      %v809 = vadd.f32 0.0, %v808
      %810 = vdwg.mxu0
      %v811 = vld [vmem:[%s5] sm:$0xff]
      %v812 = vld [vmem:[%s5 + $0x8] sm:$0xff]
      %v813 = vld [vmem:[%s5 + $0x10] sm:$0xff]
      %v814 = vld [vmem:[%s5 + $0x18] sm:$0xff]
      %v815 = vld [vmem:[%s5 + $0x20] sm:$0xff]
      %v816 = vld [vmem:[%s5 + $0x28] sm:$0xff]
      %v817 = vld [vmem:[%s5 + $0x30] sm:$0xff]
      %v818 = vld [vmem:[%s5 + $0x38] sm:$0xff]
      %v819 = vadd.f32 %v432, %v811
      %v820 = vadd.f32 %v434, %v812
      %v821 = vadd.f32 %v457, %v811
      %v822 = vadd.f32 %v459, %v812
      %v823 = vadd.f32 %v482, %v811
      %v824 = vadd.f32 %v484, %v812
      %v825 = vadd.f32 %v507, %v811
      %v826 = vadd.f32 %v509, %v812
      %v827 = vadd.f32 %v532, %v813
      %v828 = vadd.f32 %v534, %v814
      %v829 = vadd.f32 %v557, %v813
      %v830 = vadd.f32 %v559, %v814
      %v831 = vadd.f32 %v582, %v813
      %v832 = vadd.f32 %v584, %v814
      %v833 = vadd.f32 %v607, %v813
      %v834 = vadd.f32 %v609, %v814
      %v835 = vadd.f32 %v632, %v815
      %v836 = vadd.f32 %v634, %v816
      %v837 = vadd.f32 %v657, %v815
      %v838 = vadd.f32 %v659, %v816
      %v839 = vadd.f32 %v682, %v815
      %v840 = vadd.f32 %v684, %v816
      %v841 = vadd.f32 %v707, %v815
      %v842 = vadd.f32 %v709, %v816
      %v843 = vadd.f32 %v732, %v817
      %v844 = vadd.f32 %v734, %v818
      %v845 = vadd.f32 %v757, %v817
      %v846 = vadd.f32 %v759, %v818
      %v847 = vadd.f32 %v782, %v817
      %v848 = vadd.f32 %v784, %v818
      %v849 = vadd.f32 %v807, %v817
      %v850 = vadd.f32 %v809, %v818
      %vm851 = vcmask 130048
      %v852 = vsel %vm851, %v819, -inf
      %853 = vmax.xlane.f32.xlu0 %v852
      %v854 = vpop.xlane.xlu0 %853
      %v855 = vsel %vm851, %v820, -inf
      %856 = vmax.xlane.f32.xlu0 %v855
      %v857 = vpop.xlane.xlu0 %856
      %v858 = vsel %vm851, %v821, -inf
      %859 = vmax.xlane.f32.xlu0 %v858
      %v860 = vpop.xlane.xlu0 %859
      %v861 = vsel %vm851, %v822, -inf
      %862 = vmax.xlane.f32.xlu0 %v861
      %v863 = vpop.xlane.xlu0 %862
      %v864 = vsel %vm851, %v823, -inf
      %865 = vmax.xlane.f32.xlu0 %v864
      %v866 = vpop.xlane.xlu0 %865
      %v867 = vsel %vm851, %v824, -inf
      %868 = vmax.xlane.f32.xlu0 %v867
      %v869 = vpop.xlane.xlu0 %868
      %v870 = vsel %vm851, %v825, -inf
      %871 = vmax.xlane.f32.xlu0 %v870
      %v872 = vpop.xlane.xlu0 %871
      %v873 = vsel %vm851, %v826, -inf
      %874 = vmax.xlane.f32.xlu0 %v873
      %v875 = vpop.xlane.xlu0 %874
      %v876 = vsel %vm851, %v827, -inf
      %877 = vmax.xlane.f32.xlu0 %v876
      %v878 = vpop.xlane.xlu0 %877
      %v879 = vsel %vm851, %v828, -inf
      %880 = vmax.xlane.f32.xlu0 %v879
      %v881 = vpop.xlane.xlu0 %880
      %v882 = vsel %vm851, %v829, -inf
      %883 = vmax.xlane.f32.xlu0 %v882
      %v884 = vpop.xlane.xlu0 %883
      %v885 = vsel %vm851, %v830, -inf
      %886 = vmax.xlane.f32.xlu0 %v885
      %v887 = vpop.xlane.xlu0 %886
      %v888 = vsel %vm851, %v831, -inf
      %889 = vmax.xlane.f32.xlu0 %v888
      %v890 = vpop.xlane.xlu0 %889
      %v891 = vsel %vm851, %v832, -inf
      %892 = vmax.xlane.f32.xlu0 %v891
      %v893 = vpop.xlane.xlu0 %892
      %v894 = vsel %vm851, %v833, -inf
      %895 = vmax.xlane.f32.xlu0 %v894
      %v896 = vpop.xlane.xlu0 %895
      %v897 = vsel %vm851, %v834, -inf
      %898 = vmax.xlane.f32.xlu0 %v897
      %v899 = vpop.xlane.xlu0 %898
      %v900 = vsel %vm851, %v835, -inf
      %901 = vmax.xlane.f32.xlu0 %v900
      %v902 = vpop.xlane.xlu0 %901
      %v903 = vsel %vm851, %v836, -inf
      %904 = vmax.xlane.f32.xlu0 %v903
      %v905 = vpop.xlane.xlu0 %904
      %v906 = vsel %vm851, %v837, -inf
      %907 = vmax.xlane.f32.xlu0 %v906
      %v908 = vpop.xlane.xlu0 %907
      %v909 = vsel %vm851, %v838, -inf
      %910 = vmax.xlane.f32.xlu0 %v909
      %v911 = vpop.xlane.xlu0 %910
      %v912 = vsel %vm851, %v839, -inf
      %913 = vmax.xlane.f32.xlu0 %v912
      %v914 = vpop.xlane.xlu0 %913
      %v915 = vsel %vm851, %v840, -inf
      %916 = vmax.xlane.f32.xlu0 %v915
      %v917 = vpop.xlane.xlu0 %916
      %v918 = vsel %vm851, %v841, -inf
      %919 = vmax.xlane.f32.xlu0 %v918
      %v920 = vpop.xlane.xlu0 %919
      %v921 = vsel %vm851, %v842, -inf
      %922 = vmax.xlane.f32.xlu0 %v921
      %v923 = vpop.xlane.xlu0 %922
      %v924 = vsel %vm851, %v843, -inf
      %925 = vmax.xlane.f32.xlu0 %v924
      %v926 = vpop.xlane.xlu0 %925
      %v927 = vsel %vm851, %v844, -inf
      %928 = vmax.xlane.f32.xlu0 %v927
      %v929 = vpop.xlane.xlu0 %928
      %v930 = vsel %vm851, %v845, -inf
      %931 = vmax.xlane.f32.xlu0 %v930
      %v932 = vpop.xlane.xlu0 %931
      %v933 = vsel %vm851, %v846, -inf
      %934 = vmax.xlane.f32.xlu0 %v933
      %v935 = vpop.xlane.xlu0 %934
      %v936 = vsel %vm851, %v847, -inf
      %937 = vmax.xlane.f32.xlu0 %v936
      %v938 = vpop.xlane.xlu0 %937
      %v939 = vsel %vm851, %v848, -inf
      %940 = vmax.xlane.f32.xlu0 %v939
      %v941 = vpop.xlane.xlu0 %940
      %v942 = vsel %vm851, %v849, -inf
      %943 = vmax.xlane.f32.xlu0 %v942
      %v944 = vpop.xlane.xlu0 %943
      %v945 = vsel %vm851, %v850, -inf
      %946 = vmax.xlane.f32.xlu0 %v945
      %v947 = vpop.xlane.xlu0 %946
      %v948 = vsub.f32 %v819, %v854
      %v949 = vsub.f32 %v820, %v857
      %v950 = vsub.f32 %v821, %v860
      %v951 = vsub.f32 %v822, %v863
      %v952 = vsub.f32 %v823, %v866
      %v953 = vsub.f32 %v824, %v869
      %v954 = vsub.f32 %v825, %v872
      %v955 = vsub.f32 %v826, %v875
      %v956 = vsub.f32 %v827, %v878
      %v957 = vsub.f32 %v828, %v881
      %v958 = vsub.f32 %v829, %v884
      %v959 = vsub.f32 %v830, %v887
      %v960 = vsub.f32 %v831, %v890
      %v961 = vsub.f32 %v832, %v893
      %v962 = vsub.f32 %v833, %v896
      %v963 = vsub.f32 %v834, %v899
      %v964 = vsub.f32 %v835, %v902
      %v965 = vsub.f32 %v836, %v905
      %v966 = vsub.f32 %v837, %v908
      %v967 = vsub.f32 %v838, %v911
      %v968 = vsub.f32 %v839, %v914
      %v969 = vsub.f32 %v840, %v917
      %v970 = vsub.f32 %v841, %v920
      %v971 = vsub.f32 %v842, %v923
      %v972 = vsub.f32 %v843, %v926
      %v973 = vsub.f32 %v844, %v929
      %v974 = vsub.f32 %v845, %v932
      %v975 = vsub.f32 %v846, %v935
      %v976 = vsub.f32 %v847, %v938
      %v977 = vsub.f32 %v848, %v941
      %v978 = vsub.f32 %v849, %v944
      %v979 = vsub.f32 %v850, %v947
      %v980 = vmul.f32 %v948, 1.442695
      %v981 = vpow.pop %v980
      %v982 = vmul.f32 %v949, 1.442695
      %v983 = vpow.pop %v982
      %v984 = vmul.f32 %v950, 1.442695
      %v985 = vpow.pop %v984
      %v986 = vmul.f32 %v951, 1.442695
      %v987 = vpow.pop %v986
      %v988 = vmul.f32 %v952, 1.442695
      %v989 = vpow.pop %v988
      %v990 = vmul.f32 %v953, 1.442695
      %v991 = vpow.pop %v990
      %v992 = vmul.f32 %v954, 1.442695
      %v993 = vpow.pop %v992
      %v994 = vmul.f32 %v955, 1.442695
      %v995 = vpow.pop %v994
      %v996 = vmul.f32 %v956, 1.442695
      %v997 = vpow.pop %v996
      %v998 = vmul.f32 %v957, 1.442695
      %v999 = vpow.pop %v998
      %v1000 = vmul.f32 %v958, 1.442695
      %v1001 = vpow.pop %v1000
      %v1002 = vmul.f32 %v959, 1.442695
      %v1003 = vpow.pop %v1002
      %v1004 = vmul.f32 %v960, 1.442695
      %v1005 = vpow.pop %v1004
      %v1006 = vmul.f32 %v961, 1.442695
      %v1007 = vpow.pop %v1006
      %v1008 = vmul.f32 %v962, 1.442695
      %v1009 = vpow.pop %v1008
      %v1010 = vmul.f32 %v963, 1.442695
      %v1011 = vpow.pop %v1010
      %v1012 = vmul.f32 %v964, 1.442695
      %v1013 = vpow.pop %v1012
      %v1014 = vmul.f32 %v965, 1.442695
      %v1015 = vpow.pop %v1014
      %v1016 = vmul.f32 %v966, 1.442695
      %v1017 = vpow.pop %v1016
      %v1018 = vmul.f32 %v967, 1.442695
      %v1019 = vpow.pop %v1018
      %v1020 = vmul.f32 %v968, 1.442695
      %v1021 = vpow.pop %v1020
      %v1022 = vmul.f32 %v969, 1.442695
      %v1023 = vpow.pop %v1022
      %v1024 = vmul.f32 %v970, 1.442695
      %v1025 = vpow.pop %v1024
      %v1026 = vmul.f32 %v971, 1.442695
      %v1027 = vpow.pop %v1026
      %v1028 = vmul.f32 %v972, 1.442695
      %v1029 = vpow.pop %v1028
      %v1030 = vmul.f32 %v973, 1.442695
      %v1031 = vpow.pop %v1030
      %v1032 = vmul.f32 %v974, 1.442695
      %v1033 = vpow.pop %v1032
      %v1034 = vmul.f32 %v975, 1.442695
      %v1035 = vpow.pop %v1034
      %v1036 = vmul.f32 %v976, 1.442695
      %v1037 = vpow.pop %v1036
      %v1038 = vmul.f32 %v977, 1.442695
      %v1039 = vpow.pop %v1038
      %v1040 = vmul.f32 %v978, 1.442695
      %v1041 = vpow.pop %v1040
      %v1042 = vmul.f32 %v979, 1.442695
      %v1043 = vpow.pop %v1042
      %v1044 = vsel %vm851, %v981, 0.0
      %1045 = vadd.xlane.f32.xlu0 %v1044
      %v1046 = vpop.xlane.xlu0 %1045
      %v1047 = vsel %vm851, %v983, 0.0
      %1048 = vadd.xlane.f32.xlu0 %v1047
      %v1049 = vpop.xlane.xlu0 %1048
      %v1050 = vsel %vm851, %v985, 0.0
      %1051 = vadd.xlane.f32.xlu0 %v1050
      %v1052 = vpop.xlane.xlu0 %1051
      %v1053 = vsel %vm851, %v987, 0.0
      %1054 = vadd.xlane.f32.xlu0 %v1053
      %v1055 = vpop.xlane.xlu0 %1054
      %v1056 = vsel %vm851, %v989, 0.0
      %1057 = vadd.xlane.f32.xlu0 %v1056
      %v1058 = vpop.xlane.xlu0 %1057
      %v1059 = vsel %vm851, %v991, 0.0
      %1060 = vadd.xlane.f32.xlu0 %v1059
      %v1061 = vpop.xlane.xlu0 %1060
      %v1062 = vsel %vm851, %v993, 0.0
      %1063 = vadd.xlane.f32.xlu0 %v1062
      %v1064 = vpop.xlane.xlu0 %1063
      %v1065 = vsel %vm851, %v995, 0.0
      %1066 = vadd.xlane.f32.xlu0 %v1065
      %v1067 = vpop.xlane.xlu0 %1066
      %v1068 = vsel %vm851, %v997, 0.0
      %1069 = vadd.xlane.f32.xlu0 %v1068
      %v1070 = vpop.xlane.xlu0 %1069
      %v1071 = vsel %vm851, %v999, 0.0
      %1072 = vadd.xlane.f32.xlu0 %v1071
      %v1073 = vpop.xlane.xlu0 %1072
      %v1074 = vsel %vm851, %v1001, 0.0
      %1075 = vadd.xlane.f32.xlu0 %v1074
      %v1076 = vpop.xlane.xlu0 %1075
      %v1077 = vsel %vm851, %v1003, 0.0
      %1078 = vadd.xlane.f32.xlu0 %v1077
      %v1079 = vpop.xlane.xlu0 %1078
      %v1080 = vsel %vm851, %v1005, 0.0
      %1081 = vadd.xlane.f32.xlu0 %v1080
      %v1082 = vpop.xlane.xlu0 %1081
      %v1083 = vsel %vm851, %v1007, 0.0
      %1084 = vadd.xlane.f32.xlu0 %v1083
      %v1085 = vpop.xlane.xlu0 %1084
      %v1086 = vsel %vm851, %v1009, 0.0
      %1087 = vadd.xlane.f32.xlu0 %v1086
      %v1088 = vpop.xlane.xlu0 %1087
      %v1089 = vsel %vm851, %v1011, 0.0
      %1090 = vadd.xlane.f32.xlu0 %v1089
      %v1091 = vpop.xlane.xlu0 %1090
      %v1092 = vsel %vm851, %v1013, 0.0
      %1093 = vadd.xlane.f32.xlu0 %v1092
      %v1094 = vpop.xlane.xlu0 %1093
      %v1095 = vsel %vm851, %v1015, 0.0
      %1096 = vadd.xlane.f32.xlu0 %v1095
      %v1097 = vpop.xlane.xlu0 %1096
      %v1098 = vsel %vm851, %v1017, 0.0
      %1099 = vadd.xlane.f32.xlu0 %v1098
      %v1100 = vpop.xlane.xlu0 %1099
      %v1101 = vsel %vm851, %v1019, 0.0
      %1102 = vadd.xlane.f32.xlu0 %v1101
      %v1103 = vpop.xlane.xlu0 %1102
      %v1104 = vsel %vm851, %v1021, 0.0
      %1105 = vadd.xlane.f32.xlu0 %v1104
      %v1106 = vpop.xlane.xlu0 %1105
      %v1107 = vsel %vm851, %v1023, 0.0
      %1108 = vadd.xlane.f32.xlu0 %v1107
      %v1109 = vpop.xlane.xlu0 %1108
      %v1110 = vsel %vm851, %v1025, 0.0
      %1111 = vadd.xlane.f32.xlu0 %v1110
      %v1112 = vpop.xlane.xlu0 %1111
      %v1113 = vsel %vm851, %v1027, 0.0
      %1114 = vadd.xlane.f32.xlu0 %v1113
      %v1115 = vpop.xlane.xlu0 %1114
      %v1116 = vsel %vm851, %v1029, 0.0
      %1117 = vadd.xlane.f32.xlu0 %v1116
      %v1118 = vpop.xlane.xlu0 %1117
      %v1119 = vsel %vm851, %v1031, 0.0
      %1120 = vadd.xlane.f32.xlu0 %v1119
      %v1121 = vpop.xlane.xlu0 %1120
      %v1122 = vsel %vm851, %v1033, 0.0
      %1123 = vadd.xlane.f32.xlu0 %v1122
      %v1124 = vpop.xlane.xlu0 %1123
      %v1125 = vsel %vm851, %v1035, 0.0
      %1126 = vadd.xlane.f32.xlu0 %v1125
      %v1127 = vpop.xlane.xlu0 %1126
      %v1128 = vsel %vm851, %v1037, 0.0
      %1129 = vadd.xlane.f32.xlu0 %v1128
      %v1130 = vpop.xlane.xlu0 %1129
      %v1131 = vsel %vm851, %v1039, 0.0
      %1132 = vadd.xlane.f32.xlu0 %v1131
      %v1133 = vpop.xlane.xlu0 %1132
      %v1134 = vsel %vm851, %v1041, 0.0
      %1135 = vadd.xlane.f32.xlu0 %v1134
      %v1136 = vpop.xlane.xlu0 %1135
      %v1137 = vsel %vm851, %v1043, 0.0
      %1138 = vadd.xlane.f32.xlu0 %v1137
      %v1139 = vpop.xlane.xlu0 %1138
      %v1140 = vrcp.pop %v1046
      %v1141 = vrcp.pop %v1049
      %v1142 = vrcp.pop %v1052
      %v1143 = vrcp.pop %v1055
      %v1144 = vrcp.pop %v1058
      %v1145 = vrcp.pop %v1061
      %v1146 = vrcp.pop %v1064
      %v1147 = vrcp.pop %v1067
      %v1148 = vrcp.pop %v1070
      %v1149 = vrcp.pop %v1073
      %v1150 = vrcp.pop %v1076
      %v1151 = vrcp.pop %v1079
      %v1152 = vrcp.pop %v1082
      %v1153 = vrcp.pop %v1085
      %v1154 = vrcp.pop %v1088
      %v1155 = vrcp.pop %v1091
      %v1156 = vrcp.pop %v1094
      %v1157 = vrcp.pop %v1097
      %v1158 = vrcp.pop %v1100
      %v1159 = vrcp.pop %v1103
      %v1160 = vrcp.pop %v1106
      %v1161 = vrcp.pop %v1109
      %v1162 = vrcp.pop %v1112
      %v1163 = vrcp.pop %v1115
      %v1164 = vrcp.pop %v1118
      %v1165 = vrcp.pop %v1121
      %v1166 = vrcp.pop %v1124
      %v1167 = vrcp.pop %v1127
      %v1168 = vrcp.pop %v1130
      %v1169 = vrcp.pop %v1133
      %v1170 = vrcp.pop %v1136
      %v1171 = vrcp.pop %v1139
      %v1172 = vmul.f32 %v981, %v1140
      %v1173 = vmul.f32 %v983, %v1141
      %v1174 = vmul.f32 %v985, %v1142
      %v1175 = vmul.f32 %v987, %v1143
      %v1176 = vmul.f32 %v989, %v1144
      %v1177 = vmul.f32 %v991, %v1145
      %v1178 = vmul.f32 %v993, %v1146
      %v1179 = vmul.f32 %v995, %v1147
      %v1180 = vmul.f32 %v997, %v1148
      %v1181 = vmul.f32 %v999, %v1149
      %v1182 = vmul.f32 %v1001, %v1150
      %v1183 = vmul.f32 %v1003, %v1151
      %v1184 = vmul.f32 %v1005, %v1152
      %v1185 = vmul.f32 %v1007, %v1153
      %v1186 = vmul.f32 %v1009, %v1154
      %v1187 = vmul.f32 %v1011, %v1155
      %v1188 = vmul.f32 %v1013, %v1156
      %v1189 = vmul.f32 %v1015, %v1157
      %v1190 = vmul.f32 %v1017, %v1158
      %v1191 = vmul.f32 %v1019, %v1159
      %v1192 = vmul.f32 %v1021, %v1160
      %v1193 = vmul.f32 %v1023, %v1161
      %v1194 = vmul.f32 %v1025, %v1162
      %v1195 = vmul.f32 %v1027, %v1163
      %v1196 = vmul.f32 %v1029, %v1164
      %v1197 = vmul.f32 %v1031, %v1165
      %v1198 = vmul.f32 %v1033, %v1166
      %v1199 = vmul.f32 %v1035, %v1167
      %v1200 = vmul.f32 %v1037, %v1168
      %v1201 = vmul.f32 %v1039, %v1169
      %v1202 = vmul.f32 %v1041, %v1170
      %v1203 = vmul.f32 %v1043, %v1171
      %v1204 = vpack.c.bf16 %v1172, %v1172
      %v1205 = vpack.c.bf16 %v1173, %v1173
      %v1206 = vpack.c.bf16 %v1174, %v1174
      %v1207 = vpack.c.bf16 %v1175, %v1175
      %v1208 = vpack.c.bf16 %v1176, %v1176
      %v1209 = vpack.c.bf16 %v1177, %v1177
      %v1210 = vpack.c.bf16 %v1178, %v1178
      %v1211 = vpack.c.bf16 %v1179, %v1179
      %v1212 = vpack.c.bf16 %v1180, %v1180
      %v1213 = vpack.c.bf16 %v1181, %v1181
      %v1214 = vpack.c.bf16 %v1182, %v1182
      %v1215 = vpack.c.bf16 %v1183, %v1183
      %v1216 = vpack.c.bf16 %v1184, %v1184
      %v1217 = vpack.c.bf16 %v1185, %v1185
      %v1218 = vpack.c.bf16 %v1186, %v1186
      %v1219 = vpack.c.bf16 %v1187, %v1187
      %v1220 = vpack.c.bf16 %v1188, %v1188
      %v1221 = vpack.c.bf16 %v1189, %v1189
      %v1222 = vpack.c.bf16 %v1190, %v1190
      %v1223 = vpack.c.bf16 %v1191, %v1191
      %v1224 = vpack.c.bf16 %v1192, %v1192
      %v1225 = vpack.c.bf16 %v1193, %v1193
      %v1226 = vpack.c.bf16 %v1194, %v1194
      %v1227 = vpack.c.bf16 %v1195, %v1195
      %v1228 = vpack.c.bf16 %v1196, %v1196
      %v1229 = vpack.c.bf16 %v1197, %v1197
      %v1230 = vpack.c.bf16 %v1198, %v1198
      %v1231 = vpack.c.bf16 %v1199, %v1199
      %v1232 = vpack.c.bf16 %v1200, %v1200
      %v1233 = vpack.c.bf16 %v1201, %v1201
      %v1234 = vpack.c.bf16 %v1202, %v1202
      %v1235 = vpack.c.bf16 %v1203, %v1203
      %v1238 = vunpack.c.l.b16 %v1204
      %v1239 = vunpack.c.l.b16 %v1205
      %v1240 = vpack.c.b16 %v1239, %v1238
      %1241 = vrot.lane.b32.xlu0 %v412, 64
      %v1242 = vpop.permute.xlu0 %1241
      %v1245 = vsel %vm851, %v1240, 0
      %1247 = vmatpush.bf16.msra.mxu0 0
      %1248 = vmatpush.bf16.msra.mxu0 0
      %1249 = vmatpush.bf16.msra.mxu0 0
      %1250 = vmatpush.bf16.msra.mxu0 0
      %1251 = vmatpush.bf16.msra.mxu0 0
      %1252 = vmatpush.bf16.msra.mxu0 0
      %1253 = vmatpush.bf16.msra.mxu0 0
      %1254 = vmatpush.bf16.msra.mxu0 %v1242
      %1255 = vmatmul.bf16.gmra.mxu0 %v1245
      %v1256 = vpop.f32.mrf.mxu0
      %v1257 = vadd.f32 0.0, %v1256
      %v1258 = vpop.f32.mrf.mxu0
      %v1259 = vadd.f32 0.0, %v1258
      %1260 = vdwg.mxu0
      %v1263 = vunpack.c.l.b16 %v1206
      %v1264 = vunpack.c.l.b16 %v1207
      %v1265 = vpack.c.b16 %v1264, %v1263
      %1266 = vrot.lane.b32.xlu0 %v438, 64
      %v1267 = vpop.permute.xlu0 %1266
      %v1270 = vsel %vm851, %v1265, 0
      %1272 = vmatpush.bf16.msra.mxu0 0
      %1273 = vmatpush.bf16.msra.mxu0 0
      %1274 = vmatpush.bf16.msra.mxu0 0
      %1275 = vmatpush.bf16.msra.mxu0 0
      %1276 = vmatpush.bf16.msra.mxu0 0
      %1277 = vmatpush.bf16.msra.mxu0 0
      %1278 = vmatpush.bf16.msra.mxu0 0
      %1279 = vmatpush.bf16.msra.mxu0 %v1267
      %1280 = vmatmul.bf16.gmra.mxu0 %v1270
      %v1281 = vpop.f32.mrf.mxu0
      %v1282 = vadd.f32 0.0, %v1281
      %v1283 = vpop.f32.mrf.mxu0
      %v1284 = vadd.f32 0.0, %v1283
      %1285 = vdwg.mxu0
      %v1288 = vunpack.c.l.b16 %v1208
      %v1289 = vunpack.c.l.b16 %v1209
      %v1290 = vpack.c.b16 %v1289, %v1288
      %1291 = vrot.lane.b32.xlu0 %v463, 64
      %v1292 = vpop.permute.xlu0 %1291
      %v1295 = vsel %vm851, %v1290, 0
      %1297 = vmatpush.bf16.msra.mxu0 0
      %1298 = vmatpush.bf16.msra.mxu0 0
      %1299 = vmatpush.bf16.msra.mxu0 0
      %1300 = vmatpush.bf16.msra.mxu0 0
      %1301 = vmatpush.bf16.msra.mxu0 0
      %1302 = vmatpush.bf16.msra.mxu0 0
      %1303 = vmatpush.bf16.msra.mxu0 0
      %1304 = vmatpush.bf16.msra.mxu0 %v1292
      %1305 = vmatmul.bf16.gmra.mxu0 %v1295
      %v1306 = vpop.f32.mrf.mxu0
      %v1307 = vadd.f32 0.0, %v1306
      %v1308 = vpop.f32.mrf.mxu0
      %v1309 = vadd.f32 0.0, %v1308
      %1310 = vdwg.mxu0
      %v1313 = vunpack.c.l.b16 %v1210
      %v1314 = vunpack.c.l.b16 %v1211
      %v1315 = vpack.c.b16 %v1314, %v1313
      %1316 = vrot.lane.b32.xlu0 %v488, 64
      %v1317 = vpop.permute.xlu0 %1316
      %v1320 = vsel %vm851, %v1315, 0
      %1322 = vmatpush.bf16.msra.mxu0 0
      %1323 = vmatpush.bf16.msra.mxu0 0
      %1324 = vmatpush.bf16.msra.mxu0 0
      %1325 = vmatpush.bf16.msra.mxu0 0
      %1326 = vmatpush.bf16.msra.mxu0 0
      %1327 = vmatpush.bf16.msra.mxu0 0
      %1328 = vmatpush.bf16.msra.mxu0 0
      %1329 = vmatpush.bf16.msra.mxu0 %v1317
      %1330 = vmatmul.bf16.gmra.mxu0 %v1320
      %v1331 = vpop.f32.mrf.mxu0
      %v1332 = vadd.f32 0.0, %v1331
      %v1333 = vpop.f32.mrf.mxu0
      %v1334 = vadd.f32 0.0, %v1333
      %1335 = vdwg.mxu0
      %v1338 = vunpack.c.l.b16 %v1212
      %v1339 = vunpack.c.l.b16 %v1213
      %v1340 = vpack.c.b16 %v1339, %v1338
      %1341 = vrot.lane.b32.xlu0 %v513, 64
      %v1342 = vpop.permute.xlu0 %1341
      %v1345 = vsel %vm851, %v1340, 0
      %1347 = vmatpush.bf16.msra.mxu0 0
      %1348 = vmatpush.bf16.msra.mxu0 0
      %1349 = vmatpush.bf16.msra.mxu0 0
      %1350 = vmatpush.bf16.msra.mxu0 0
      %1351 = vmatpush.bf16.msra.mxu0 0
      %1352 = vmatpush.bf16.msra.mxu0 0
      %1353 = vmatpush.bf16.msra.mxu0 0
      %1354 = vmatpush.bf16.msra.mxu0 %v1342
      %1355 = vmatmul.bf16.gmra.mxu0 %v1345
      %v1356 = vpop.f32.mrf.mxu0
      %v1357 = vadd.f32 0.0, %v1356
      %v1358 = vpop.f32.mrf.mxu0
      %v1359 = vadd.f32 0.0, %v1358
      %1360 = vdwg.mxu0
      %v1363 = vunpack.c.l.b16 %v1214
      %v1364 = vunpack.c.l.b16 %v1215
      %v1365 = vpack.c.b16 %v1364, %v1363
      %1366 = vrot.lane.b32.xlu0 %v538, 64
      %v1367 = vpop.permute.xlu0 %1366
      %v1370 = vsel %vm851, %v1365, 0
      %1372 = vmatpush.bf16.msra.mxu0 0
      %1373 = vmatpush.bf16.msra.mxu0 0
      %1374 = vmatpush.bf16.msra.mxu0 0
      %1375 = vmatpush.bf16.msra.mxu0 0
      %1376 = vmatpush.bf16.msra.mxu0 0
      %1377 = vmatpush.bf16.msra.mxu0 0
      %1378 = vmatpush.bf16.msra.mxu0 0
      %1379 = vmatpush.bf16.msra.mxu0 %v1367
      %1380 = vmatmul.bf16.gmra.mxu0 %v1370
      %v1381 = vpop.f32.mrf.mxu0
      %v1382 = vadd.f32 0.0, %v1381
      %v1383 = vpop.f32.mrf.mxu0
      %v1384 = vadd.f32 0.0, %v1383
      %1385 = vdwg.mxu0
      %v1388 = vunpack.c.l.b16 %v1216
      %v1389 = vunpack.c.l.b16 %v1217
      %v1390 = vpack.c.b16 %v1389, %v1388
      %1391 = vrot.lane.b32.xlu0 %v563, 64
      %v1392 = vpop.permute.xlu0 %1391
      %v1395 = vsel %vm851, %v1390, 0
      %1397 = vmatpush.bf16.msra.mxu0 0
      %1398 = vmatpush.bf16.msra.mxu0 0
      %1399 = vmatpush.bf16.msra.mxu0 0
      %1400 = vmatpush.bf16.msra.mxu0 0
      %1401 = vmatpush.bf16.msra.mxu0 0
      %1402 = vmatpush.bf16.msra.mxu0 0
      %1403 = vmatpush.bf16.msra.mxu0 0
      %1404 = vmatpush.bf16.msra.mxu0 %v1392
      %1405 = vmatmul.bf16.gmra.mxu0 %v1395
      %v1406 = vpop.f32.mrf.mxu0
      %v1407 = vadd.f32 0.0, %v1406
      %v1408 = vpop.f32.mrf.mxu0
      %v1409 = vadd.f32 0.0, %v1408
      %1410 = vdwg.mxu0
      %v1413 = vunpack.c.l.b16 %v1218
      %v1414 = vunpack.c.l.b16 %v1219
      %v1415 = vpack.c.b16 %v1414, %v1413
      %1416 = vrot.lane.b32.xlu0 %v588, 64
      %v1417 = vpop.permute.xlu0 %1416
      %v1420 = vsel %vm851, %v1415, 0
      %1422 = vmatpush.bf16.msra.mxu0 0
      %1423 = vmatpush.bf16.msra.mxu0 0
      %1424 = vmatpush.bf16.msra.mxu0 0
      %1425 = vmatpush.bf16.msra.mxu0 0
      %1426 = vmatpush.bf16.msra.mxu0 0
      %1427 = vmatpush.bf16.msra.mxu0 0
      %1428 = vmatpush.bf16.msra.mxu0 0
      %1429 = vmatpush.bf16.msra.mxu0 %v1417
      %1430 = vmatmul.bf16.gmra.mxu0 %v1420
      %v1431 = vpop.f32.mrf.mxu0
      %v1432 = vadd.f32 0.0, %v1431
      %v1433 = vpop.f32.mrf.mxu0
      %v1434 = vadd.f32 0.0, %v1433
      %1435 = vdwg.mxu0
      %v1438 = vunpack.c.l.b16 %v1220
      %v1439 = vunpack.c.l.b16 %v1221
      %v1440 = vpack.c.b16 %v1439, %v1438
      %1441 = vrot.lane.b32.xlu0 %v613, 64
      %v1442 = vpop.permute.xlu0 %1441
      %v1445 = vsel %vm851, %v1440, 0
      %1447 = vmatpush.bf16.msra.mxu0 0
      %1448 = vmatpush.bf16.msra.mxu0 0
      %1449 = vmatpush.bf16.msra.mxu0 0
      %1450 = vmatpush.bf16.msra.mxu0 0
      %1451 = vmatpush.bf16.msra.mxu0 0
      %1452 = vmatpush.bf16.msra.mxu0 0
      %1453 = vmatpush.bf16.msra.mxu0 0
      %1454 = vmatpush.bf16.msra.mxu0 %v1442
      %1455 = vmatmul.bf16.gmra.mxu0 %v1445
      %v1456 = vpop.f32.mrf.mxu0
      %v1457 = vadd.f32 0.0, %v1456
      %v1458 = vpop.f32.mrf.mxu0
      %v1459 = vadd.f32 0.0, %v1458
      %1460 = vdwg.mxu0
      %v1463 = vunpack.c.l.b16 %v1222
      %v1464 = vunpack.c.l.b16 %v1223
      %v1465 = vpack.c.b16 %v1464, %v1463
      %1466 = vrot.lane.b32.xlu0 %v638, 64
      %v1467 = vpop.permute.xlu0 %1466
      %v1470 = vsel %vm851, %v1465, 0
      %1472 = vmatpush.bf16.msra.mxu0 0
      %1473 = vmatpush.bf16.msra.mxu0 0
      %1474 = vmatpush.bf16.msra.mxu0 0
      %1475 = vmatpush.bf16.msra.mxu0 0
      %1476 = vmatpush.bf16.msra.mxu0 0
      %1477 = vmatpush.bf16.msra.mxu0 0
      %1478 = vmatpush.bf16.msra.mxu0 0
      %1479 = vmatpush.bf16.msra.mxu0 %v1467
      %1480 = vmatmul.bf16.gmra.mxu0 %v1470
      %v1481 = vpop.f32.mrf.mxu0
      %v1482 = vadd.f32 0.0, %v1481
      %v1483 = vpop.f32.mrf.mxu0
      %v1484 = vadd.f32 0.0, %v1483
      %1485 = vdwg.mxu0
      %v1488 = vunpack.c.l.b16 %v1224
      %v1489 = vunpack.c.l.b16 %v1225
      %v1490 = vpack.c.b16 %v1489, %v1488
      %1491 = vrot.lane.b32.xlu0 %v663, 64
      %v1492 = vpop.permute.xlu0 %1491
      %v1495 = vsel %vm851, %v1490, 0
      %1497 = vmatpush.bf16.msra.mxu0 0
      %1498 = vmatpush.bf16.msra.mxu0 0
      %1499 = vmatpush.bf16.msra.mxu0 0
      %1500 = vmatpush.bf16.msra.mxu0 0
      %1501 = vmatpush.bf16.msra.mxu0 0
      %1502 = vmatpush.bf16.msra.mxu0 0
      %1503 = vmatpush.bf16.msra.mxu0 0
      %1504 = vmatpush.bf16.msra.mxu0 %v1492
      %1505 = vmatmul.bf16.gmra.mxu0 %v1495
      %v1506 = vpop.f32.mrf.mxu0
      %v1507 = vadd.f32 0.0, %v1506
      %v1508 = vpop.f32.mrf.mxu0
      %v1509 = vadd.f32 0.0, %v1508
      %1510 = vdwg.mxu0
      %v1513 = vunpack.c.l.b16 %v1226
      %v1514 = vunpack.c.l.b16 %v1227
      %v1515 = vpack.c.b16 %v1514, %v1513
      %1516 = vrot.lane.b32.xlu0 %v688, 64
      %v1517 = vpop.permute.xlu0 %1516
      %v1520 = vsel %vm851, %v1515, 0
      %1522 = vmatpush.bf16.msra.mxu0 0
      %1523 = vmatpush.bf16.msra.mxu0 0
      %1524 = vmatpush.bf16.msra.mxu0 0
      %1525 = vmatpush.bf16.msra.mxu0 0
      %1526 = vmatpush.bf16.msra.mxu0 0
      %1527 = vmatpush.bf16.msra.mxu0 0
      %1528 = vmatpush.bf16.msra.mxu0 0
      %1529 = vmatpush.bf16.msra.mxu0 %v1517
      %1530 = vmatmul.bf16.gmra.mxu0 %v1520
      %v1531 = vpop.f32.mrf.mxu0
      %v1532 = vadd.f32 0.0, %v1531
      %v1533 = vpop.f32.mrf.mxu0
      %v1534 = vadd.f32 0.0, %v1533
      %1535 = vdwg.mxu0
      %v1538 = vunpack.c.l.b16 %v1228
      %v1539 = vunpack.c.l.b16 %v1229
      %v1540 = vpack.c.b16 %v1539, %v1538
      %1541 = vrot.lane.b32.xlu0 %v713, 64
      %v1542 = vpop.permute.xlu0 %1541
      %v1545 = vsel %vm851, %v1540, 0
      %1547 = vmatpush.bf16.msra.mxu0 0
      %1548 = vmatpush.bf16.msra.mxu0 0
      %1549 = vmatpush.bf16.msra.mxu0 0
      %1550 = vmatpush.bf16.msra.mxu0 0
      %1551 = vmatpush.bf16.msra.mxu0 0
      %1552 = vmatpush.bf16.msra.mxu0 0
      %1553 = vmatpush.bf16.msra.mxu0 0
      %1554 = vmatpush.bf16.msra.mxu0 %v1542
      %1555 = vmatmul.bf16.gmra.mxu0 %v1545
      %v1556 = vpop.f32.mrf.mxu0
      %v1557 = vadd.f32 0.0, %v1556
      %v1558 = vpop.f32.mrf.mxu0
      %v1559 = vadd.f32 0.0, %v1558
      %1560 = vdwg.mxu0
      %v1563 = vunpack.c.l.b16 %v1230
      %v1564 = vunpack.c.l.b16 %v1231
      %v1565 = vpack.c.b16 %v1564, %v1563
      %1566 = vrot.lane.b32.xlu0 %v738, 64
      %v1567 = vpop.permute.xlu0 %1566
      %v1570 = vsel %vm851, %v1565, 0
      %1572 = vmatpush.bf16.msra.mxu0 0
      %1573 = vmatpush.bf16.msra.mxu0 0
      %1574 = vmatpush.bf16.msra.mxu0 0
      %1575 = vmatpush.bf16.msra.mxu0 0
      %1576 = vmatpush.bf16.msra.mxu0 0
      %1577 = vmatpush.bf16.msra.mxu0 0
      %1578 = vmatpush.bf16.msra.mxu0 0
      %1579 = vmatpush.bf16.msra.mxu0 %v1567
      %1580 = vmatmul.bf16.gmra.mxu0 %v1570
      %v1581 = vpop.f32.mrf.mxu0
      %v1582 = vadd.f32 0.0, %v1581
      %v1583 = vpop.f32.mrf.mxu0
      %v1584 = vadd.f32 0.0, %v1583
      %1585 = vdwg.mxu0
      %v1588 = vunpack.c.l.b16 %v1232
      %v1589 = vunpack.c.l.b16 %v1233
      %v1590 = vpack.c.b16 %v1589, %v1588
      %1591 = vrot.lane.b32.xlu0 %v763, 64
      %v1592 = vpop.permute.xlu0 %1591
      %v1595 = vsel %vm851, %v1590, 0
      %1597 = vmatpush.bf16.msra.mxu0 0
      %1598 = vmatpush.bf16.msra.mxu0 0
      %1599 = vmatpush.bf16.msra.mxu0 0
      %1600 = vmatpush.bf16.msra.mxu0 0
      %1601 = vmatpush.bf16.msra.mxu0 0
      %1602 = vmatpush.bf16.msra.mxu0 0
      %1603 = vmatpush.bf16.msra.mxu0 0
      %1604 = vmatpush.bf16.msra.mxu0 %v1592
      %1605 = vmatmul.bf16.gmra.mxu0 %v1595
      %v1606 = vpop.f32.mrf.mxu0
      %v1607 = vadd.f32 0.0, %v1606
      %v1608 = vpop.f32.mrf.mxu0
      %v1609 = vadd.f32 0.0, %v1608
      %1610 = vdwg.mxu0
      %v1613 = vunpack.c.l.b16 %v1234
      %v1614 = vunpack.c.l.b16 %v1235
      %v1615 = vpack.c.b16 %v1614, %v1613
      %1616 = vrot.lane.b32.xlu0 %v788, 64
      %v1617 = vpop.permute.xlu0 %1616
      %v1620 = vsel %vm851, %v1615, 0
      %1622 = vmatpush.bf16.msra.mxu0 0
      %1623 = vmatpush.bf16.msra.mxu0 0
      %1624 = vmatpush.bf16.msra.mxu0 0
      %1625 = vmatpush.bf16.msra.mxu0 0
      %1626 = vmatpush.bf16.msra.mxu0 0
      %1627 = vmatpush.bf16.msra.mxu0 0
      %1628 = vmatpush.bf16.msra.mxu0 0
      %1629 = vmatpush.bf16.msra.mxu0 %v1617
      %1630 = vmatmul.bf16.gmra.mxu0 %v1620
      %v1631 = vpop.f32.mrf.mxu0
      %v1632 = vadd.f32 0.0, %v1631
      %v1633 = vpop.f32.mrf.mxu0
      %v1634 = vadd.f32 0.0, %v1633
      %1635 = vdwg.mxu0
      %v1636 = vpack.c.bf16 %v1257, %v1257
      %v1637 = vpack.c.bf16 %v1259, %v1259
      %v1638 = vpack.c.bf16 %v1282, %v1282
      %v1639 = vpack.c.bf16 %v1284, %v1284
      %v1640 = vpack.c.bf16 %v1307, %v1307
      %v1641 = vpack.c.bf16 %v1309, %v1309
      %v1642 = vpack.c.bf16 %v1332, %v1332
      %v1643 = vpack.c.bf16 %v1334, %v1334
      %v1644 = vpack.c.bf16 %v1357, %v1357
      %v1645 = vpack.c.bf16 %v1359, %v1359
      %v1646 = vpack.c.bf16 %v1382, %v1382
      %v1647 = vpack.c.bf16 %v1384, %v1384
      %v1648 = vpack.c.bf16 %v1407, %v1407
      %v1649 = vpack.c.bf16 %v1409, %v1409
      %v1650 = vpack.c.bf16 %v1432, %v1432
      %v1651 = vpack.c.bf16 %v1434, %v1434
      %v1652 = vpack.c.bf16 %v1457, %v1457
      %v1653 = vpack.c.bf16 %v1459, %v1459
      %v1654 = vpack.c.bf16 %v1482, %v1482
      %v1655 = vpack.c.bf16 %v1484, %v1484
      %v1656 = vpack.c.bf16 %v1507, %v1507
      %v1657 = vpack.c.bf16 %v1509, %v1509
      %v1658 = vpack.c.bf16 %v1532, %v1532
      %v1659 = vpack.c.bf16 %v1534, %v1534
      %v1660 = vpack.c.bf16 %v1557, %v1557
      %v1661 = vpack.c.bf16 %v1559, %v1559
      %v1662 = vpack.c.bf16 %v1582, %v1582
      %v1663 = vpack.c.bf16 %v1584, %v1584
      %v1664 = vpack.c.bf16 %v1607, %v1607
      %v1665 = vpack.c.bf16 %v1609, %v1609
      %v1666 = vpack.c.bf16 %v1632, %v1632
      %v1667 = vpack.c.bf16 %v1634, %v1634
      %v1676 = vunpack.c.l.b16 %v1636
      %v1677 = vunpack.c.l.b16 %v1637
      %v1678 = vunpack.c.l.b16 %v1638
      %v1679 = vunpack.c.l.b16 %v1639
      %v1680 = vunpack.c.l.b16 %v1640
      %v1681 = vunpack.c.l.b16 %v1641
      %v1682 = vunpack.c.l.b16 %v1642
      %v1683 = vunpack.c.l.b16 %v1643
      %v1684 = vpack.c.b16 %v1677, %v1676
      %v1685 = vpack.c.b16 %v1679, %v1678
      %v1686 = vpack.c.b16 %v1681, %v1680
      %v1687 = vpack.c.b16 %v1683, %v1682
      %v1696 = vunpack.c.l.b16 %v1644
      %v1697 = vunpack.c.l.b16 %v1645
      %v1698 = vunpack.c.l.b16 %v1646
      %v1699 = vunpack.c.l.b16 %v1647
      %v1700 = vunpack.c.l.b16 %v1648
      %v1701 = vunpack.c.l.b16 %v1649
      %v1702 = vunpack.c.l.b16 %v1650
      %v1703 = vunpack.c.l.b16 %v1651
      %v1704 = vpack.c.b16 %v1697, %v1696
      %v1705 = vpack.c.b16 %v1699, %v1698
      %v1706 = vpack.c.b16 %v1701, %v1700
      %v1707 = vpack.c.b16 %v1703, %v1702
      %1708 = vrot.lane.b32.xlu0 %v1704, 8
      %v1709 = vpop.permute.xlu0 %1708
      %1710 = vrot.lane.b32.xlu0 %v1705, 8
      %v1711 = vpop.permute.xlu0 %1710
      %1712 = vrot.lane.b32.xlu0 %v1706, 8
      %v1713 = vpop.permute.xlu0 %1712
      %1714 = vrot.lane.b32.xlu0 %v1707, 8
      %v1715 = vpop.permute.xlu0 %1714
      %v1724 = vunpack.c.l.b16 %v1652
      %v1725 = vunpack.c.l.b16 %v1653
      %v1726 = vunpack.c.l.b16 %v1654
      %v1727 = vunpack.c.l.b16 %v1655
      %v1728 = vunpack.c.l.b16 %v1656
      %v1729 = vunpack.c.l.b16 %v1657
      %v1730 = vunpack.c.l.b16 %v1658
      %v1731 = vunpack.c.l.b16 %v1659
      %v1732 = vpack.c.b16 %v1725, %v1724
      %v1733 = vpack.c.b16 %v1727, %v1726
      %v1734 = vpack.c.b16 %v1729, %v1728
      %v1735 = vpack.c.b16 %v1731, %v1730
      %1736 = vrot.lane.b32.xlu0 %v1732, 16
      %v1737 = vpop.permute.xlu0 %1736
      %1738 = vrot.lane.b32.xlu0 %v1733, 16
      %v1739 = vpop.permute.xlu0 %1738
      %1740 = vrot.lane.b32.xlu0 %v1734, 16
      %v1741 = vpop.permute.xlu0 %1740
      %1742 = vrot.lane.b32.xlu0 %v1735, 16
      %v1743 = vpop.permute.xlu0 %1742
      %v1752 = vunpack.c.l.b16 %v1660
      %v1753 = vunpack.c.l.b16 %v1661
      %v1754 = vunpack.c.l.b16 %v1662
      %v1755 = vunpack.c.l.b16 %v1663
      %v1756 = vunpack.c.l.b16 %v1664
      %v1757 = vunpack.c.l.b16 %v1665
      %v1758 = vunpack.c.l.b16 %v1666
      %v1759 = vunpack.c.l.b16 %v1667
      %v1760 = vpack.c.b16 %v1753, %v1752
      %v1761 = vpack.c.b16 %v1755, %v1754
      %v1762 = vpack.c.b16 %v1757, %v1756
      %v1763 = vpack.c.b16 %v1759, %v1758
      %1764 = vrot.lane.b32.xlu0 %v1760, 24
      %v1765 = vpop.permute.xlu0 %1764
      %1766 = vrot.lane.b32.xlu0 %v1761, 24
      %v1767 = vpop.permute.xlu0 %1766
      %1768 = vrot.lane.b32.xlu0 %v1762, 24
      %v1769 = vpop.permute.xlu0 %1768
      %1770 = vrot.lane.b32.xlu0 %v1763, 24
      %v1771 = vpop.permute.xlu0 %1770
      %v1774 = vsel %vm415, %v1684, %v1709
      %v1777 = vsel %vm415, %v1685, %v1711
      %v1780 = vsel %vm415, %v1686, %v1713
      %v1783 = vsel %vm415, %v1687, %v1715
      %v1785 = vsel %vm851, %v1774, %v1737
      %v1787 = vsel %vm851, %v1777, %v1739
      %v1789 = vsel %vm851, %v1780, %v1741
      %v1791 = vsel %vm851, %v1783, %v1743
      %vm1792 = vcmask 195584
      %v1794 = vsel %vm1792, %v1785, %v1765
      %v1796 = vsel %vm1792, %v1787, %v1767
      %v1798 = vsel %vm1792, %v1789, %v1769
      %v1800 = vsel %vm1792, %v1791, %v1771
      %v1801 = vld [vmem:[%s3] sm:$0xf]
      %v1802 = vld [vmem:[%s3 + $0x4] sm:$0xf]
      %v1803 = vld [vmem:[%s3 + $0x8] sm:$0xf]
      %v1804 = vld [vmem:[%s3 + $0xc] sm:$0xf]
      %v1805 = vld [vmem:[%s4] sm:$0x1]
      %v1807 = vperm.slane %v1805, 0
      %v1813 = vunpack.c.l.b16 %v1801
      %v1814 = vunpack.c.l.b16 %v1802
      %v1815 = vunpack.c.l.b16 %v1803
      %v1816 = vunpack.c.l.b16 %v1804
      %v1817 = vpack.c.b16 %v1814, %v1813
      %v1818 = vpack.c.b16 %v1816, %v1815
      %v1821 = vsel %vm304, %v1794, 0
      %v1823 = vsel %vm304, %v1796, 0
      %v1825 = vsel %vm304, %v1798, 0
      %v1827 = vsel %vm304, %v1800, 0
      %1829 = vmatpush.bf16.msra.mxu0 0
      %1830 = vmatpush.bf16.msra.mxu0 0
      %1831 = vmatpush.bf16.msra.mxu0 0
      %1832 = vmatpush.bf16.msra.mxu0 0
      %1833 = vmatpush.bf16.msra.mxu0 0
      %1834 = vmatpush.bf16.msra.mxu0 0
      %1835 = vmatpush.bf16.msra.mxu0 %v1818
      %1836 = vmatpush.bf16.msra.mxu0 %v1817
      %1837 = vmatmul.bf16.gmra.mxu0 %v1821
      %v1838 = vpop.f32.mrf.mxu0
      %v1839 = vadd.f32 %v1807, %v1838
      %v1840 = vpop.f32.mrf.mxu0
      %v1841 = vadd.f32 %v1807, %v1840
      %1842 = vmatmul.bf16.gmra.mxu0 %v1823
      %v1843 = vpop.f32.mrf.mxu0
      %v1844 = vadd.f32 %v1807, %v1843
      %v1845 = vpop.f32.mrf.mxu0
      %v1846 = vadd.f32 %v1807, %v1845
      %1847 = vmatmul.bf16.gmra.mxu0 %v1825
      %v1848 = vpop.f32.mrf.mxu0
      %v1849 = vadd.f32 %v1807, %v1848
      %v1850 = vpop.f32.mrf.mxu0
      %v1851 = vadd.f32 %v1807, %v1850
      %1852 = vmatmul.bf16.gmra.mxu0 %v1827
      %v1853 = vpop.f32.mrf.mxu0
      %v1854 = vadd.f32 %v1807, %v1853
      %v1855 = vpop.f32.mrf.mxu0
      %v1856 = vadd.f32 %v1807, %v1855
      %1857 = vdwg.mxu0
      %1858 = vst.msk [vmem:[%s253] sm:$0xff] %vm304, %v1839
      %1859 = vst.msk [vmem:[%s253 + $0x8] sm:$0xff] %vm304, %v1841
      %1860 = vst.msk [vmem:[%s253 + $0x10] sm:$0xff] %vm304, %v1844
      %1861 = vst.msk [vmem:[%s253 + $0x18] sm:$0xff] %vm304, %v1846
      %1862 = vst.msk [vmem:[%s253 + $0x20] sm:$0xff] %vm304, %v1849
      %1863 = vst.msk [vmem:[%s253 + $0x28] sm:$0xff] %vm304, %v1851
      %1864 = vst.msk [vmem:[%s253 + $0x30] sm:$0xff] %vm304, %v1854
      %1865 = vst.msk [vmem:[%s253 + $0x38] sm:$0xff] %vm304, %v1856
      %s1866 = smul.u32 8, %s17
      %p1867 = scmp.lt.s32.totalorder %s1866, 31
      %s1868 = scalar_select %p1867, %s1866, 31
      %s1869 = smul.addr %s1868, 8
      %s1870 = scalar_lea.vmem %s6, %s1869
      // Predicated region
      $region45: #{tpu_custom_call.1} parent=43 // pred_check
        %p1871 = pneg %p166
      $region46: #{tpu_custom_call.1} parent=43 // pred_check_branch
        %1873 = sbr.rel (%p1871) target = $region48
      $region47: #{tpu_custom_call.1} parent=43 // pred_region
        %s1874 = smul.u32 8, %s17
      $region48: #{tpu_custom_call.1} parent=43 // pred_fallthru
        _
    $region44: #{tpu_custom_call.1} parent=5 // pred_fallthru
      _
    %p1875 = scmp.le.s32.totalorder 2, %s12
    // Predicated region
    $region49: #{tpu_custom_call.1} parent=5 // pred_check
      %p1876 = pneg %p1875
    $region50: #{tpu_custom_call.1} parent=5 // pred_check_branch
      %1878 = sbr.rel (%p1876) target = $region52
    $region51: #{tpu_custom_call.1} parent=5 // pred_region
      %s1879 = ssub.s32 %s12, 2
      // Predicated region
      $region53: #{tpu_custom_call.1} parent=51 // pred_check
        %p1880 = pneg %p172
      $region54: #{tpu_custom_call.1} parent=51 // pred_check_branch
        %1882 = sbr.rel (%p1880) target = $region56
      $region55: #{tpu_custom_call.1} parent=51 // pred_region
        %s1883 = smul.u32 8, %s18
        %p1884 = scmp.lt.s32.totalorder %s1883, 31
        %s1885 = scalar_select %p1884, %s1883, 31
        %s1886 = smul.addr %s1885, 8
        %s1887 = scalar_lea.vmem %s6, %s1886
      $region56: #{tpu_custom_call.1} parent=51 // pred_fallthru
        _
    $region52: #{tpu_custom_call.1} parent=5 // pred_fallthru
      _
  $region6: #{tpu_custom_call.1} parent=0 // loop_footer
    %s16 = sadd.s32 1, %s12
  $region7: #{tpu_custom_call.1} parent=0 // loop_footer_branch
    %11 = sbr.rel target = $region3
  $region8: #{tpu_custom_call.1} parent=0 // loop_exit
    _

</llo_original>
